<compile_context>
chip_gen: v7x
topology: tpu7x:2x2x1
jax: 0.10.0
libtpu: 0.0.40
codegen_flags: <defaults>
</compile_context>

<pallas_src>
import jax
import jax.numpy as jnp
from jax.experimental import pallas as pl
from jax.experimental.pallas import tpu as pltpu

_LANE = 128


def _round_up(n, m):
    return ((n + m - 1) // m) * m


def _pad2(a, rows, cols):
    return jnp.pad(a, ((0, rows - a.shape[0]), (0, cols - a.shape[1])))


def _vae_kernel(x_ref, eps_ref,
                ew1, eb1, ew2, eb2, ew3, eb3, wh, bh,
                dw1, db1, dw2, db2, dw3, db3, wrec, brec,
                rec_ref, mu_ref, ls_ref):
    """Full VAE forward pass for one batch tile (all features lane-padded)."""

    def lin(h, w_ref, b_ref):
        # bf16 MXU matmul with f32 accumulation; bias add in f32.
        return jnp.dot(h.astype(jnp.bfloat16), w_ref[...],
                       preferred_element_type=jnp.float32) + b_ref[...]

    # Encoder MLP: Linear + ReLU (x3).  Element-wise math stays in f32.
    h = jnp.maximum(lin(x_ref[...], ew1, eb1), 0.0)
    h = jnp.maximum(lin(h, ew2, eb2), 0.0)
    h = jnp.maximum(lin(h, ew3, eb3), 0.0)

    # Fused mu / log_sigma head: one (hp, 2*zp) matmul, then lane-aligned split.
    zp = mu_ref.shape[-1]
    head = lin(h, wh, bh)
    mu = head[:, :zp]
    log_sigma = head[:, zp:]

    # Reparameterization trick: z = mu + exp(0.5 * log_sigma) * eps   (f32)
    z = mu + jnp.exp(0.5 * log_sigma) * eps_ref[...]

    # Decoder MLP: Linear + ReLU (x3) + reconstruction Linear.
    d = jnp.maximum(lin(z, dw1, db1), 0.0)
    d = jnp.maximum(lin(d, dw2, db2), 0.0)
    d = jnp.maximum(lin(d, dw3, db3), 0.0)
    rec = lin(d, wrec, brec)

    rec_ref[...] = rec
    mu_ref[...] = mu
    ls_ref[...] = log_sigma


def vae_forward(x, eps, params, *, block_b=128):
    """Run the full VAE forward pass in one batch-gridded Pallas kernel.

    x:      (B, data_dim) float32
    eps:    (B, z_dim)    float32   (the randn_like noise for reparameterization)
    params: tuple of 18 arrays (weights (in, out) f32, biases (1, out) f32)
    Returns (rec, mu, log_sigma) with the original (un-padded) shapes.
    """
    (ew1, eb1, ew2, eb2, ew3, eb3, wmu, bmu, wls, bls,
     dw1, db1, dw2, db2, dw3, db3, wrec, brec) = params

    B, data_dim = x.shape
    z_dim = eps.shape[1]
    hidden_dim = ew1.shape[1]

    # Lane-dense padded dims.
    dp = _round_up(data_dim, _LANE)
    zp = _round_up(z_dim, _LANE)
    hp = _round_up(hidden_dim, _LANE)

    # Batch tile (multiple of 16 for bf16 sublane packing) and padded batch.
    TB = min(block_b, _round_up(B, 16))
    Bp = _round_up(B, TB)

    bf16 = jnp.bfloat16

    # --- pad & pack parameters: weights -> bf16, biases -> f32 ---------------
    padded_params = (
        _pad2(ew1, dp, hp).astype(bf16), _pad2(eb1, 1, hp),
        _pad2(ew2, hp, hp).astype(bf16), _pad2(eb2, 1, hp),
        _pad2(ew3, hp, hp).astype(bf16), _pad2(eb3, 1, hp),
        # fused mu | log_sigma head
        jnp.concatenate([_pad2(wmu, hp, zp), _pad2(wls, hp, zp)], axis=1).astype(bf16),
        jnp.concatenate([_pad2(bmu, 1, zp), _pad2(bls, 1, zp)], axis=1),
        _pad2(dw1, zp, hp).astype(bf16), _pad2(db1, 1, hp),
        _pad2(dw2, hp, hp).astype(bf16), _pad2(db2, 1, hp),
        _pad2(dw3, hp, hp).astype(bf16), _pad2(db3, 1, hp),
        _pad2(wrec, hp, dp).astype(bf16), _pad2(brec, 1, dp),
    )

    x_p = _pad2(x, Bp, dp).astype(bf16)   # matmul-only input -> bf16 halves DMA
    eps_p = _pad2(eps, Bp, zp)            # used in f32 element-wise path

    grid = (Bp // TB,)

    batch_spec = lambda shape: pl.BlockSpec(shape, lambda i: (i, 0))
    resident_spec = lambda p: pl.BlockSpec(p.shape, lambda i: (0, 0))

    in_specs = ([batch_spec((TB, dp)), batch_spec((TB, zp))] +
                [resident_spec(p) for p in padded_params])
    out_specs = (batch_spec((TB, dp)), batch_spec((TB, zp)), batch_spec((TB, zp)))
    out_shape = (
        jax.ShapeDtypeStruct((Bp, dp), jnp.float32),   # rec (padded)
        jax.ShapeDtypeStruct((Bp, zp), jnp.float32),   # mu  (padded)
        jax.ShapeDtypeStruct((Bp, zp), jnp.float32),   # log_sigma (padded)
    )

    # --- cost estimate (helps XLA overlap surrounding ops, e.g. the randn) ---
    mm_dims = [(dp, hp), (hp, hp), (hp, hp), (hp, 2 * zp),
               (zp, hp), (hp, hp), (hp, hp), (hp, dp)]
    flops = 2 * Bp * sum(k * n for k, n in mm_dims)
    param_bytes = sum(int(p.size) * p.dtype.itemsize for p in padded_params)
    io_bytes = (int(x_p.size) * 2 + int(eps_p.size) * 4 +
                Bp * (dp + 2 * zp) * 4)
    cost = pl.CostEstimate(flops=flops,
                           transcendentals=Bp * zp,
                           bytes_accessed=param_bytes + io_bytes)

    # --- VMEM budget: resident weights + double-buffered batch tiles ---------
    tile_io_bytes = TB * (dp * 2 + zp * 4 + dp * 4 + 2 * zp * 4)
    act_bytes = TB * max(hp, 2 * zp) * 4 * 8           # headroom for temporaries
    vmem_limit = 2 * param_bytes + 2 * tile_io_bytes + act_bytes + (1 << 20)
    vmem_limit = int(min(max(vmem_limit, 8 << 20), 64 << 20))  # v7x-safe cap

    rec_p, mu_p, ls_p = pl.pallas_call(
        _vae_kernel,
        out_shape=out_shape,
        grid=grid,
        in_specs=in_specs,
        out_specs=out_specs,
        compiler_params=pltpu.CompilerParams(
            dimension_semantics=("parallel",),
            vmem_limit_bytes=vmem_limit),
        cost_estimate=cost,
    )(x_p, eps_p, *padded_params)

    # Strip padding.
    return (rec_p[:B, :data_dim], mu_p[:B, :z_dim], ls_p[:B, :z_dim])


def init_params(key, data_dim, hidden_dim, z_dim):
    """Deterministic parameter init. Weights (in, out), biases (1, out), f32."""
    dims = [
        # encoder MLP
        (data_dim, hidden_dim), (hidden_dim, hidden_dim), (hidden_dim, hidden_dim),
        # mu / log_sigma heads
        (hidden_dim, z_dim), (hidden_dim, z_dim),
        # decoder MLP
        (z_dim, hidden_dim), (hidden_dim, hidden_dim), (hidden_dim, hidden_dim),
        # reconstruct
        (hidden_dim, data_dim),
    ]
    params = []
    for (fan_in, fan_out) in dims:
        key, kw, kb = jax.random.split(key, 3)
        bound = 1.0 / jnp.sqrt(fan_in)  # PyTorch nn.Linear default init range
        w = jax.random.uniform(kw, (fan_in, fan_out), jnp.float32, -bound, bound)
        b = jax.random.uniform(kb, (1, fan_out), jnp.float32, -bound, bound)
        params.extend([w, b])
    return tuple(params)


def vae_forward_ref(x, eps, params, matmul_dtype=jnp.float32):
    """Pure-JAX reference.  matmul_dtype=bfloat16 mimics the kernel's precision."""
    (ew1, eb1, ew2, eb2, ew3, eb3, wmu, bmu, wls, bls,
     dw1, db1, dw2, db2, dw3, db3, wrec, brec) = params

    def lin(h, w, b):
        return jnp.dot(h.astype(matmul_dtype), w.astype(matmul_dtype),
                       preferred_element_type=jnp.float32) + b

    h = jnp.maximum(lin(x, ew1, eb1), 0.0)
    h = jnp.maximum(lin(h, ew2, eb2), 0.0)
    h = jnp.maximum(lin(h, ew3, eb3), 0.0)
    mu = lin(h, wmu, bmu)
    log_sigma = lin(h, wls, bls)
    z = mu + jnp.exp(0.5 * log_sigma) * eps
    d = jnp.maximum(lin(z, dw1, db1), 0.0)
    d = jnp.maximum(lin(d, dw2, db2), 0.0)
    d = jnp.maximum(lin(d, dw3, db3), 0.0)
    rec = lin(d, wrec, brec)
    return rec, mu, log_sigma


if __name__ == "__main__":
    # Small shapes consistent with the module: VAE(data_dim, hidden_dim, z_dim).
    batch, data_dim, hidden_dim, z_dim = 8, 4, 32, 4

    key = jax.random.PRNGKey(0)
    key, kx, keps, kp = jax.random.split(key, 4)

    x = jax.random.normal(kx, (batch, data_dim), jnp.float32)
    eps = jax.random.normal(keps, (batch, z_dim), jnp.float32)  # torch.randn_like(std)
    params = init_params(kp, data_dim, hidden_dim, z_dim)

    rec, mu, log_sigma = vae_forward(x, eps, params)
    jax.block_until_ready((rec, mu, log_sigma))

    assert rec.shape == (batch, data_dim)
    assert mu.shape == (batch, z_dim)
    assert log_sigma.shape == (batch, z_dim)

    # Tight check against a precision-matched reference (bf16 matmuls, f32 acc).
    rec_m, mu_m, ls_m = vae_forward_ref(x, eps, params, matmul_dtype=jnp.bfloat16)
    assert jnp.allclose(rec, rec_m, atol=1e-4, rtol=1e-4)
    assert jnp.allclose(mu, mu_m, atol=1e-4, rtol=1e-4)
    assert jnp.allclose(log_sigma, ls_m, atol=1e-4, rtol=1e-4)

    # Loose sanity check against pure-f32 math.
    rec_f, mu_f, ls_f = vae_forward_ref(x, eps, params, matmul_dtype=jnp.float32)
    assert jnp.allclose(rec, rec_f, atol=5e-2, rtol=5e-2)
    assert jnp.allclose(mu, mu_f, atol=5e-2, rtol=5e-2)
    assert jnp.allclose(log_sigma, ls_f, atol=5e-2, rtol=5e-2)

    print("KERNEL_OK")
</pallas_src>

<mosaic_0001>
module attributes {stable_mosaic.version = 11 : i64} {
  func.func @_vae_kernel(%arg0: i32, %arg1: memref<16x128xbf16, #tpu.memory_space<vmem>>, %arg2: memref<16x128xf32, #tpu.memory_space<vmem>>, %arg3: memref<128x128xbf16, #tpu.memory_space<vmem>>, %arg4: memref<1x128xf32, #tpu.memory_space<vmem>>, %arg5: memref<128x128xbf16, #tpu.memory_space<vmem>>, %arg6: memref<1x128xf32, #tpu.memory_space<vmem>>, %arg7: memref<128x128xbf16, #tpu.memory_space<vmem>>, %arg8: memref<1x128xf32, #tpu.memory_space<vmem>>, %arg9: memref<128x256xbf16, #tpu.memory_space<vmem>>, %arg10: memref<1x256xf32, #tpu.memory_space<vmem>>, %arg11: memref<128x128xbf16, #tpu.memory_space<vmem>>, %arg12: memref<1x128xf32, #tpu.memory_space<vmem>>, %arg13: memref<128x128xbf16, #tpu.memory_space<vmem>>, %arg14: memref<1x128xf32, #tpu.memory_space<vmem>>, %arg15: memref<128x128xbf16, #tpu.memory_space<vmem>>, %arg16: memref<1x128xf32, #tpu.memory_space<vmem>>, %arg17: memref<128x128xbf16, #tpu.memory_space<vmem>>, %arg18: memref<1x128xf32, #tpu.memory_space<vmem>>, %arg19: memref<16x128xf32, #tpu.memory_space<vmem>>, %arg20: memref<16x128xf32, #tpu.memory_space<vmem>>, %arg21: memref<16x128xf32, #tpu.memory_space<vmem>>) attributes {dimension_semantics = [#tpu.dimension_semantics<parallel>], iteration_bounds = array<i64: 1>, scalar_prefetch = 0 : i64, scratch_operands = 0 : i64, tpu.core_type = #tpu.core_type<tc>, window_params = [{transform_indices = @transform_0, window_bounds = array<i64: 16, 128>}, {transform_indices = @transform_1, window_bounds = array<i64: 16, 128>}, {pipeline_mode = #tpu.pipeline_mode<synchronous>, transform_indices = @transform_2, window_bounds = array<i64: 128, 128>}, {pipeline_mode = #tpu.pipeline_mode<synchronous>, transform_indices = @transform_3, window_bounds = array<i64: 1, 128>}, {pipeline_mode = #tpu.pipeline_mode<synchronous>, transform_indices = @transform_4, window_bounds = array<i64: 128, 128>}, {pipeline_mode = #tpu.pipeline_mode<synchronous>, transform_indices = @transform_5, window_bounds = array<i64: 1, 128>}, {pipeline_mode = #tpu.pipeline_mode<synchronous>, transform_indices = @transform_6, window_bounds = array<i64: 128, 128>}, {pipeline_mode = #tpu.pipeline_mode<synchronous>, transform_indices = @transform_7, window_bounds = array<i64: 1, 128>}, {pipeline_mode = #tpu.pipeline_mode<synchronous>, transform_indices = @transform_8, window_bounds = array<i64: 128, 256>}, {pipeline_mode = #tpu.pipeline_mode<synchronous>, transform_indices = @transform_9, window_bounds = array<i64: 1, 256>}, {pipeline_mode = #tpu.pipeline_mode<synchronous>, transform_indices = @transform_10, window_bounds = array<i64: 128, 128>}, {pipeline_mode = #tpu.pipeline_mode<synchronous>, transform_indices = @transform_11, window_bounds = array<i64: 1, 128>}, {pipeline_mode = #tpu.pipeline_mode<synchronous>, transform_indices = @transform_12, window_bounds = array<i64: 128, 128>}, {pipeline_mode = #tpu.pipeline_mode<synchronous>, transform_indices = @transform_13, window_bounds = array<i64: 1, 128>}, {pipeline_mode = #tpu.pipeline_mode<synchronous>, transform_indices = @transform_14, window_bounds = array<i64: 128, 128>}, {pipeline_mode = #tpu.pipeline_mode<synchronous>, transform_indices = @transform_15, window_bounds = array<i64: 1, 128>}, {pipeline_mode = #tpu.pipeline_mode<synchronous>, transform_indices = @transform_16, window_bounds = array<i64: 128, 128>}, {pipeline_mode = #tpu.pipeline_mode<synchronous>, transform_indices = @transform_17, window_bounds = array<i64: 1, 128>}, {transform_indices = @transform_18, window_bounds = array<i64: 16, 128>}, {transform_indices = @transform_19, window_bounds = array<i64: 16, 128>}, {transform_indices = @transform_20, window_bounds = array<i64: 16, 128>}]} {
    %c0 = arith.constant 0 : index
    %c0_0 = arith.constant 0 : index
    %0 = vector.load %arg1[%c0, %c0_0] : memref<16x128xbf16, #tpu.memory_space<vmem>>, vector<16x128xbf16>
    %c0_1 = arith.constant 0 : index
    %c0_2 = arith.constant 0 : index
    %1 = vector.load %arg3[%c0_1, %c0_2] : memref<128x128xbf16, #tpu.memory_space<vmem>>, vector<128x128xbf16>
    %cst = arith.constant dense<0.000000e+00> : vector<16x128xf32>
    %2 = tpu.matmul %0, %1, %cst {dimension_numbers = #tpu.dot_dimension_numbers<[1], [0], [0], [1], [0, 0, 1, 1], [], []>} : vector<16x128xbf16>, vector<128x128xbf16>, vector<16x128xf32> -> vector<16x128xf32>
    %c0_3 = arith.constant 0 : index
    %c0_4 = arith.constant 0 : index
    %3 = vector.load %arg4[%c0_3, %c0_4] : memref<1x128xf32, #tpu.memory_space<vmem>>, vector<1x128xf32>
    %4 = vector.broadcast %3 : vector<1x128xf32> to vector<16x128xf32>
    %5 = arith.addf %2, %4 : vector<16x128xf32>
    %cst_5 = arith.constant 0.000000e+00 : f32
    %6 = vector.broadcast %cst_5 : f32 to vector<16x128xf32>
    %7 = arith.maximumf %5, %6 : vector<16x128xf32>
    %8 = arith.truncf %7 : vector<16x128xf32> to vector<16x128xbf16>
    %c0_6 = arith.constant 0 : index
    %c0_7 = arith.constant 0 : index
    %9 = vector.load %arg5[%c0_6, %c0_7] : memref<128x128xbf16, #tpu.memory_space<vmem>>, vector<128x128xbf16>
    %cst_8 = arith.constant dense<0.000000e+00> : vector<16x128xf32>
    %10 = tpu.matmul %8, %9, %cst_8 {dimension_numbers = #tpu.dot_dimension_numbers<[1], [0], [0], [1], [0, 0, 1, 1], [], []>} : vector<16x128xbf16>, vector<128x128xbf16>, vector<16x128xf32> -> vector<16x128xf32>
    %c0_9 = arith.constant 0 : index
    %c0_10 = arith.constant 0 : index
    %11 = vector.load %arg6[%c0_9, %c0_10] : memref<1x128xf32, #tpu.memory_space<vmem>>, vector<1x128xf32>
    %12 = vector.broadcast %11 : vector<1x128xf32> to vector<16x128xf32>
    %13 = arith.addf %10, %12 : vector<16x128xf32>
    %cst_11 = arith.constant 0.000000e+00 : f32
    %14 = vector.broadcast %cst_11 : f32 to vector<16x128xf32>
    %15 = arith.maximumf %13, %14 : vector<16x128xf32>
    %16 = arith.truncf %15 : vector<16x128xf32> to vector<16x128xbf16>
    %c0_12 = arith.constant 0 : index
    %c0_13 = arith.constant 0 : index
    %17 = vector.load %arg7[%c0_12, %c0_13] : memref<128x128xbf16, #tpu.memory_space<vmem>>, vector<128x128xbf16>
    %cst_14 = arith.constant dense<0.000000e+00> : vector<16x128xf32>
    %18 = tpu.matmul %16, %17, %cst_14 {dimension_numbers = #tpu.dot_dimension_numbers<[1], [0], [0], [1], [0, 0, 1, 1], [], []>} : vector<16x128xbf16>, vector<128x128xbf16>, vector<16x128xf32> -> vector<16x128xf32>
    %c0_15 = arith.constant 0 : index
    %c0_16 = arith.constant 0 : index
    %19 = vector.load %arg8[%c0_15, %c0_16] : memref<1x128xf32, #tpu.memory_space<vmem>>, vector<1x128xf32>
    %20 = vector.broadcast %19 : vector<1x128xf32> to vector<16x128xf32>
    %21 = arith.addf %18, %20 : vector<16x128xf32>
    %cst_17 = arith.constant 0.000000e+00 : f32
    %22 = vector.broadcast %cst_17 : f32 to vector<16x128xf32>
    %23 = arith.maximumf %21, %22 : vector<16x128xf32>
    %24 = arith.truncf %23 : vector<16x128xf32> to vector<16x128xbf16>
    %c0_18 = arith.constant 0 : index
    %c0_19 = arith.constant 0 : index
    %25 = vector.load %arg9[%c0_18, %c0_19] : memref<128x256xbf16, #tpu.memory_space<vmem>>, vector<128x256xbf16>
    %cst_20 = arith.constant dense<0.000000e+00> : vector<16x256xf32>
    %26 = tpu.matmul %24, %25, %cst_20 {dimension_numbers = #tpu.dot_dimension_numbers<[1], [0], [0], [1], [0, 0, 1, 1], [], []>} : vector<16x128xbf16>, vector<128x256xbf16>, vector<16x256xf32> -> vector<16x256xf32>
    %c0_21 = arith.constant 0 : index
    %c0_22 = arith.constant 0 : index
    %27 = vector.load %arg10[%c0_21, %c0_22] : memref<1x256xf32, #tpu.memory_space<vmem>>, vector<1x256xf32>
    %28 = vector.broadcast %27 : vector<1x256xf32> to vector<16x256xf32>
    %29 = arith.addf %26, %28 : vector<16x256xf32>
    %30 = vector.extract_strided_slice %29 {offsets = [0, 0], sizes = [16, 128], strides = [1, 1]} : vector<16x256xf32> to vector<16x128xf32>
    %31 = vector.extract_strided_slice %29 {offsets = [0, 128], sizes = [16, 128], strides = [1, 1]} : vector<16x256xf32> to vector<16x128xf32>
    %cst_23 = arith.constant 5.000000e-01 : f32
    %32 = vector.broadcast %cst_23 : f32 to vector<16x128xf32>
    %33 = arith.mulf %32, %31 : vector<16x128xf32>
    %34 = math.exp %33 : vector<16x128xf32>
    %c0_24 = arith.constant 0 : index
    %c0_25 = arith.constant 0 : index
    %35 = vector.load %arg2[%c0_24, %c0_25] : memref<16x128xf32, #tpu.memory_space<vmem>>, vector<16x128xf32>
    %36 = arith.mulf %34, %35 : vector<16x128xf32>
    %37 = arith.addf %30, %36 : vector<16x128xf32>
    %38 = arith.truncf %37 : vector<16x128xf32> to vector<16x128xbf16>
    %c0_26 = arith.constant 0 : index
    %c0_27 = arith.constant 0 : index
    %39 = vector.load %arg11[%c0_26, %c0_27] : memref<128x128xbf16, #tpu.memory_space<vmem>>, vector<128x128xbf16>
    %cst_28 = arith.constant dense<0.000000e+00> : vector<16x128xf32>
    %40 = tpu.matmul %38, %39, %cst_28 {dimension_numbers = #tpu.dot_dimension_numbers<[1], [0], [0], [1], [0, 0, 1, 1], [], []>} : vector<16x128xbf16>, vector<128x128xbf16>, vector<16x128xf32> -> vector<16x128xf32>
    %c0_29 = arith.constant 0 : index
    %c0_30 = arith.constant 0 : index
    %41 = vector.load %arg12[%c0_29, %c0_30] : memref<1x128xf32, #tpu.memory_space<vmem>>, vector<1x128xf32>
    %42 = vector.broadcast %41 : vector<1x128xf32> to vector<16x128xf32>
    %43 = arith.addf %40, %42 : vector<16x128xf32>
    %cst_31 = arith.constant 0.000000e+00 : f32
    %44 = vector.broadcast %cst_31 : f32 to vector<16x128xf32>
    %45 = arith.maximumf %43, %44 : vector<16x128xf32>
    %46 = arith.truncf %45 : vector<16x128xf32> to vector<16x128xbf16>
    %c0_32 = arith.constant 0 : index
    %c0_33 = arith.constant 0 : index
    %47 = vector.load %arg13[%c0_32, %c0_33] : memref<128x128xbf16, #tpu.memory_space<vmem>>, vector<128x128xbf16>
    %cst_34 = arith.constant dense<0.000000e+00> : vector<16x128xf32>
    %48 = tpu.matmul %46, %47, %cst_34 {dimension_numbers = #tpu.dot_dimension_numbers<[1], [0], [0], [1], [0, 0, 1, 1], [], []>} : vector<16x128xbf16>, vector<128x128xbf16>, vector<16x128xf32> -> vector<16x128xf32>
    %c0_35 = arith.constant 0 : index
    %c0_36 = arith.constant 0 : index
    %49 = vector.load %arg14[%c0_35, %c0_36] : memref<1x128xf32, #tpu.memory_space<vmem>>, vector<1x128xf32>
    %50 = vector.broadcast %49 : vector<1x128xf32> to vector<16x128xf32>
    %51 = arith.addf %48, %50 : vector<16x128xf32>
    %cst_37 = arith.constant 0.000000e+00 : f32
    %52 = vector.broadcast %cst_37 : f32 to vector<16x128xf32>
    %53 = arith.maximumf %51, %52 : vector<16x128xf32>
    %54 = arith.truncf %53 : vector<16x128xf32> to vector<16x128xbf16>
    %c0_38 = arith.constant 0 : index
    %c0_39 = arith.constant 0 : index
    %55 = vector.load %arg15[%c0_38, %c0_39] : memref<128x128xbf16, #tpu.memory_space<vmem>>, vector<128x128xbf16>
    %cst_40 = arith.constant dense<0.000000e+00> : vector<16x128xf32>
    %56 = tpu.matmul %54, %55, %cst_40 {dimension_numbers = #tpu.dot_dimension_numbers<[1], [0], [0], [1], [0, 0, 1, 1], [], []>} : vector<16x128xbf16>, vector<128x128xbf16>, vector<16x128xf32> -> vector<16x128xf32>
    %c0_41 = arith.constant 0 : index
    %c0_42 = arith.constant 0 : index
    %57 = vector.load %arg16[%c0_41, %c0_42] : memref<1x128xf32, #tpu.memory_space<vmem>>, vector<1x128xf32>
    %58 = vector.broadcast %57 : vector<1x128xf32> to vector<16x128xf32>
    %59 = arith.addf %56, %58 : vector<16x128xf32>
    %cst_43 = arith.constant 0.000000e+00 : f32
    %60 = vector.broadcast %cst_43 : f32 to vector<16x128xf32>
    %61 = arith.maximumf %59, %60 : vector<16x128xf32>
    %62 = arith.truncf %61 : vector<16x128xf32> to vector<16x128xbf16>
    %c0_44 = arith.constant 0 : index
    %c0_45 = arith.constant 0 : index
    %63 = vector.load %arg17[%c0_44, %c0_45] : memref<128x128xbf16, #tpu.memory_space<vmem>>, vector<128x128xbf16>
    %cst_46 = arith.constant dense<0.000000e+00> : vector<16x128xf32>
    %64 = tpu.matmul %62, %63, %cst_46 {dimension_numbers = #tpu.dot_dimension_numbers<[1], [0], [0], [1], [0, 0, 1, 1], [], []>} : vector<16x128xbf16>, vector<128x128xbf16>, vector<16x128xf32> -> vector<16x128xf32>
    %c0_47 = arith.constant 0 : index
    %c0_48 = arith.constant 0 : index
    %65 = vector.load %arg18[%c0_47, %c0_48] : memref<1x128xf32, #tpu.memory_space<vmem>>, vector<1x128xf32>
    %66 = vector.broadcast %65 : vector<1x128xf32> to vector<16x128xf32>
    %67 = arith.addf %64, %66 : vector<16x128xf32>
    %c0_49 = arith.constant 0 : index
    %c0_50 = arith.constant 0 : index
    %68 = vector.load %arg19[%c0_49, %c0_50] : memref<16x128xf32, #tpu.memory_space<vmem>>, vector<16x128xf32>
    tpu.vector_store %arg19[%c0_49, %c0_50], %67 {strides = array<i32>} : memref<16x128xf32, #tpu.memory_space<vmem>>, vector<16x128xf32>,
    %c0_51 = arith.constant 0 : index
    %c0_52 = arith.constant 0 : index
    %69 = vector.load %arg20[%c0_51, %c0_52] : memref<16x128xf32, #tpu.memory_space<vmem>>, vector<16x128xf32>
    tpu.vector_store %arg20[%c0_51, %c0_52], %30 {strides = array<i32>} : memref<16x128xf32, #tpu.memory_space<vmem>>, vector<16x128xf32>,
    %c0_53 = arith.constant 0 : index
    %c0_54 = arith.constant 0 : index
    %70 = vector.load %arg21[%c0_53, %c0_54] : memref<16x128xf32, #tpu.memory_space<vmem>>, vector<16x128xf32>
    tpu.vector_store %arg21[%c0_53, %c0_54], %31 {strides = array<i32>} : memref<16x128xf32, #tpu.memory_space<vmem>>, vector<16x128xf32>,
    return
  }
  func.func @transform_0(%arg0: i32) -> (i32, i32) {
    %c0_i32 = arith.constant 0 : i32
    %c0_i32_0 = arith.constant 0 : i32
    return %arg0, %c0_i32 : i32, i32
  }
  func.func @transform_1(%arg0: i32) -> (i32, i32) {
    %c0_i32 = arith.constant 0 : i32
    %c0_i32_0 = arith.constant 0 : i32
    return %arg0, %c0_i32 : i32, i32
  }
  func.func @transform_2(%arg0: i32) -> (i32, i32) {
    %c0_i32 = arith.constant 0 : i32
    %c0_i32_0 = arith.constant 0 : i32
    %c0_i32_1 = arith.constant 0 : i32
    return %c0_i32, %c0_i32_0 : i32, i32
  }
  func.func @transform_3(%arg0: i32) -> (i32, i32) {
    %c0_i32 = arith.constant 0 : i32
    %c0_i32_0 = arith.constant 0 : i32
    %c0_i32_1 = arith.constant 0 : i32
    return %c0_i32, %c0_i32_0 : i32, i32
  }
  func.func @transform_4(%arg0: i32) -> (i32, i32) {
    %c0_i32 = arith.constant 0 : i32
    %c0_i32_0 = arith.constant 0 : i32
    %c0_i32_1 = arith.constant 0 : i32
    return %c0_i32, %c0_i32_0 : i32, i32
  }
  func.func @transform_5(%arg0: i32) -> (i32, i32) {
    %c0_i32 = arith.constant 0 : i32
    %c0_i32_0 = arith.constant 0 : i32
    %c0_i32_1 = arith.constant 0 : i32
    return %c0_i32, %c0_i32_0 : i32, i32
  }
  func.func @transform_6(%arg0: i32) -> (i32, i32) {
    %c0_i32 = arith.constant 0 : i32
    %c0_i32_0 = arith.constant 0 : i32
    %c0_i32_1 = arith.constant 0 : i32
    return %c0_i32, %c0_i32_0 : i32, i32
  }
  func.func @transform_7(%arg0: i32) -> (i32, i32) {
    %c0_i32 = arith.constant 0 : i32
    %c0_i32_0 = arith.constant 0 : i32
    %c0_i32_1 = arith.constant 0 : i32
    return %c0_i32, %c0_i32_0 : i32, i32
  }
  func.func @transform_8(%arg0: i32) -> (i32, i32) {
    %c0_i32 = arith.constant 0 : i32
    %c0_i32_0 = arith.constant 0 : i32
    %c0_i32_1 = arith.constant 0 : i32
    return %c0_i32, %c0_i32_0 : i32, i32
  }
  func.func @transform_9(%arg0: i32) -> (i32, i32) {
    %c0_i32 = arith.constant 0 : i32
    %c0_i32_0 = arith.constant 0 : i32
    %c0_i32_1 = arith.constant 0 : i32
    return %c0_i32, %c0_i32_0 : i32, i32
  }
  func.func @transform_10(%arg0: i32) -> (i32, i32) {
    %c0_i32 = arith.constant 0 : i32
    %c0_i32_0 = arith.constant 0 : i32
    %c0_i32_1 = arith.constant 0 : i32
    return %c0_i32, %c0_i32_0 : i32, i32
  }
  func.func @transform_11(%arg0: i32) -> (i32, i32) {
    %c0_i32 = arith.constant 0 : i32
    %c0_i32_0 = arith.constant 0 : i32
    %c0_i32_1 = arith.constant 0 : i32
    return %c0_i32, %c0_i32_0 : i32, i32
  }
  func.func @transform_12(%arg0: i32) -> (i32, i32) {
    %c0_i32 = arith.constant 0 : i32
    %c0_i32_0 = arith.constant 0 : i32
    %c0_i32_1 = arith.constant 0 : i32
    return %c0_i32, %c0_i32_0 : i32, i32
  }
  func.func @transform_13(%arg0: i32) -> (i32, i32) {
    %c0_i32 = arith.constant 0 : i32
    %c0_i32_0 = arith.constant 0 : i32
    %c0_i32_1 = arith.constant 0 : i32
    return %c0_i32, %c0_i32_0 : i32, i32
  }
  func.func @transform_14(%arg0: i32) -> (i32, i32) {
    %c0_i32 = arith.constant 0 : i32
    %c0_i32_0 = arith.constant 0 : i32
    %c0_i32_1 = arith.constant 0 : i32
    return %c0_i32, %c0_i32_0 : i32, i32
  }
  func.func @transform_15(%arg0: i32) -> (i32, i32) {
    %c0_i32 = arith.constant 0 : i32
    %c0_i32_0 = arith.constant 0 : i32
    %c0_i32_1 = arith.constant 0 : i32
    return %c0_i32, %c0_i32_0 : i32, i32
  }
  func.func @transform_16(%arg0: i32) -> (i32, i32) {
    %c0_i32 = arith.constant 0 : i32
    %c0_i32_0 = arith.constant 0 : i32
    %c0_i32_1 = arith.constant 0 : i32
    return %c0_i32, %c0_i32_0 : i32, i32
  }
  func.func @transform_17(%arg0: i32) -> (i32, i32) {
    %c0_i32 = arith.constant 0 : i32
    %c0_i32_0 = arith.constant 0 : i32
    %c0_i32_1 = arith.constant 0 : i32
    return %c0_i32, %c0_i32_0 : i32, i32
  }
  func.func @transform_18(%arg0: i32) -> (i32, i32) {
    %c0_i32 = arith.constant 0 : i32
    %c0_i32_0 = arith.constant 0 : i32
    return %arg0, %c0_i32 : i32, i32
  }
  func.func @transform_19(%arg0: i32) -> (i32, i32) {
    %c0_i32 = arith.constant 0 : i32
    %c0_i32_0 = arith.constant 0 : i32
    return %arg0, %c0_i32 : i32, i32
  }
  func.func @transform_20(%arg0: i32) -> (i32, i32) {
    %c0_i32 = arith.constant 0 : i32
    %c0_i32_0 = arith.constant 0 : i32
    return %arg0, %c0_i32 : i32, i32
  }
}

</mosaic_0001>

<llo_original>
// kernel: tpu_custom_call.1
$region0: #{tpu_custom_call.1}
  #allocation0 [shape = 'u32[]', space=smem, size = 0x4, offset = 0x4, fixed_abs, tag = 'smem constant byte address 0x4 - core index']
  #allocation1 [shape = 'u32[144,128]{1,0:T(1,128)}', space=vmem, size = 0x12000, scoped, tag = 'internal scratch']
  %s0 = inlined_call_operand.hbm [shape: bf16[16,128], index: 0, kind: input, shape index: {}]
  %s1 = inlined_call_operand.hbm [shape: f32[16,128], index: 1, kind: input, shape index: {}]
  %s2 = inlined_call_operand.hbm [shape: bf16[128,128], index: 2, kind: input, shape index: {}]
  %s3 = inlined_call_operand.vmem [shape: f32[1,128], index: 3, kind: input, shape index: {}]
  %s4 = inlined_call_operand.hbm [shape: bf16[128,128], index: 4, kind: input, shape index: {}]
  %s5 = inlined_call_operand.vmem [shape: f32[1,128], index: 5, kind: input, shape index: {}]
  %s6 = inlined_call_operand.hbm [shape: bf16[128,128], index: 6, kind: input, shape index: {}]
  %s7 = inlined_call_operand.vmem [shape: f32[1,128], index: 7, kind: input, shape index: {}]
  %s8 = inlined_call_operand.hbm [shape: bf16[128,256], index: 8, kind: input, shape index: {}]
  %s9 = inlined_call_operand.vmem [shape: f32[1,256], index: 9, kind: input, shape index: {}]
  %s10 = inlined_call_operand.hbm [shape: bf16[128,128], index: 10, kind: input, shape index: {}]
  %s11 = inlined_call_operand.vmem [shape: f32[1,128], index: 11, kind: input, shape index: {}]
  %s12 = inlined_call_operand.hbm [shape: bf16[128,128], index: 12, kind: input, shape index: {}]
  %s13 = inlined_call_operand.vmem [shape: f32[1,128], index: 13, kind: input, shape index: {}]
  %s14 = inlined_call_operand.hbm [shape: bf16[128,128], index: 14, kind: input, shape index: {}]
  %s15 = inlined_call_operand.vmem [shape: f32[1,128], index: 15, kind: input, shape index: {}]
  %s16 = inlined_call_operand.hbm [shape: bf16[128,128], index: 16, kind: input, shape index: {}]
  %s17 = inlined_call_operand.vmem [shape: f32[1,128], index: 17, kind: input, shape index: {}]
  %s18 = inlined_call_operand.hbm [shape: f32[16,128], index: 18, kind: output, shape index: {0}]
  %s19 = inlined_call_operand.hbm [shape: f32[16,128], index: 19, kind: output, shape index: {1}]
  %s20 = inlined_call_operand.hbm [shape: f32[16,128], index: 20, kind: output, shape index: {2}]
  %21 = xla_tuple %s18, %s19, %s20
  %s22 = sld [smem:[#allocation0]]
  $region138: #{tpu_custom_call.1} parent=0
    _
  %s24 = ssub.s32 1, %s22
  %s25 = scalar_select 0, %s24, %s22
  $region1: #{tpu_custom_call.1} parent=0
    #allocation2 [shape = 'u8[4096]{0}', space=vmem, size = 0x1000, scoped, tag = 'input window, operand 0, single buffered']
    #allocation3 [shape = 's32[1]{0}', space=sflag, size = 0x4, scoped, tag = 'scoped memory for tpu_custom_call.1']
    #allocation4 [shape = 's32[1]{0}', space=sflag, size = 0x4, scoped, tag = 'scoped memory for tpu_custom_call.1']
    #allocation5 [shape = 'u8[8192]{0}', space=vmem, size = 0x2000, scoped, tag = 'input window, operand 1, single buffered']
    #allocation6 [shape = 's32[1]{0}', space=sflag, size = 0x4, scoped, tag = 'scoped memory for tpu_custom_call.1']
    #allocation7 [shape = 'u8[32768]{0}', space=vmem, size = 0x8000, scoped, tag = 'input window, operand 2, single buffered']
    #allocation8 [shape = 'u8[32768]{0}', space=vmem, size = 0x8000, scoped, tag = 'input window, operand 4, single buffered']
    #allocation9 [shape = 's32[1]{0}', space=sflag, size = 0x4, scoped, tag = 'scoped memory for tpu_custom_call.1']
    #allocation10 [shape = 'u8[32768]{0}', space=vmem, size = 0x8000, scoped, tag = 'input window, operand 6, single buffered']
    #allocation11 [shape = 'u8[65536]{0}', space=vmem, size = 0x10000, scoped, tag = 'input window, operand 8, single buffered']
    #allocation12 [shape = 's32[1]{0}', space=sflag, size = 0x4, scoped, tag = 'scoped memory for tpu_custom_call.1']
    #allocation13 [shape = 'u8[32768]{0}', space=vmem, size = 0x8000, scoped, tag = 'input window, operand 10, single buffered']
    #allocation14 [shape = 'u8[32768]{0}', space=vmem, size = 0x8000, scoped, tag = 'input window, operand 12, single buffered']
    #allocation15 [shape = 's32[1]{0}', space=sflag, size = 0x4, scoped, tag = 'scoped memory for tpu_custom_call.1']
    #allocation16 [shape = 'u8[32768]{0}', space=vmem, size = 0x8000, scoped, tag = 'input window, operand 14, single buffered']
    #allocation17 [shape = 'u8[32768]{0}', space=vmem, size = 0x8000, scoped, tag = 'input window, operand 16, single buffered']
    #allocation18 [shape = 's32[1]{0}', space=sflag, size = 0x4, scoped, tag = 'scoped memory for tpu_custom_call.1']
    #allocation19 [shape = 'u8[8192]{0}', space=vmem, size = 0x2000, scoped, tag = 'output window, operand 0, single buffered']
    #allocation20 [shape = 'u8[8192]{0}', space=vmem, size = 0x2000, scoped, tag = 'output window, operand 1, single buffered']
    #allocation21 [shape = 's32[1]{0}', space=sflag, size = 0x4, scoped, tag = 'scoped memory for tpu_custom_call.1']
    #allocation22 [shape = 'u8[8192]{0}', space=vmem, size = 0x2000, scoped, tag = 'output window, operand 2, single buffered']
    %26 = vsyncpa [#allocation3], 0
    %27 = vsyncpa [#allocation6], 0
    %28 = vsyncpa [#allocation9], 0
    %29 = vsyncpa [#allocation12], 0
    %30 = vsyncpa [#allocation15], 0
    %31 = vsyncpa [#allocation18], 0
    %32 = vsyncpa [#allocation4], 0
    %33 = vsyncpa [#allocation21], 0
    // Predicated region
    $region2: #{tpu_custom_call.1} parent=1 // pred_check
      _
    $region3: #{tpu_custom_call.1} parent=1 // pred_check_branch
      %35 = sbr.rel (0) target = $region5
    $region4: #{tpu_custom_call.1} parent=1 // pred_region
      %s37 = ssub.s32 128, 128
      %38 = vsyncadd [#allocation3], %s37
      %s39 = sshll.u32 [#allocation2], 4
      %s40 = int_to_ptr.vmem [resolvable:$true] %s39
      %45 = dma.hbm_to_vmem [thread:$0]  %s0, 128, %s40, [#allocation3], 64, 64, 4
    $region5: #{tpu_custom_call.1} parent=1 // pred_fallthru
      _
    // Predicated region
    $region6: #{tpu_custom_call.1} parent=1 // pred_check
      _
    $region7: #{tpu_custom_call.1} parent=1 // pred_check_branch
      %47 = sbr.rel (0) target = $region9
    $region8: #{tpu_custom_call.1} parent=1 // pred_region
      %s49 = ssub.s32 256, 256
      %50 = vsyncadd [#allocation6], %s49
      %s51 = sshll.u32 [#allocation5], 4
      %s52 = int_to_ptr.vmem [resolvable:$true] %s51
      %57 = dma.hbm_to_vmem [thread:$0]  %s1, 256, %s52, [#allocation6], 128, 128, 8
    $region9: #{tpu_custom_call.1} parent=1 // pred_fallthru
      _
    // Predicated region
    $region10: #{tpu_custom_call.1} parent=1 // pred_check
      _
    $region11: #{tpu_custom_call.1} parent=1 // pred_check_branch
      %59 = sbr.rel (0) target = $region13
    $region12: #{tpu_custom_call.1} parent=1 // pred_region
      %s61 = ssub.s32 1024, 1024
      %62 = vsyncadd [#allocation6], %s61
      %s63 = sshll.u32 [#allocation7], 4
      %s64 = int_to_ptr.vmem [resolvable:$true] %s63
      %69 = dma.hbm_to_vmem [thread:$0]  %s2, 1024, %s64, [#allocation6], 64, 64, 4
    $region13: #{tpu_custom_call.1} parent=1 // pred_fallthru
      _
    // Predicated region
    $region14: #{tpu_custom_call.1} parent=1 // pred_check
      _
    $region15: #{tpu_custom_call.1} parent=1 // pred_check_branch
      %71 = sbr.rel (0) target = $region17
    $region16: #{tpu_custom_call.1} parent=1 // pred_region
      _
    $region17: #{tpu_custom_call.1} parent=1 // pred_fallthru
      _
    // Predicated region
    $region18: #{tpu_custom_call.1} parent=1 // pred_check
      _
    $region19: #{tpu_custom_call.1} parent=1 // pred_check_branch
      %73 = sbr.rel (0) target = $region21
    $region20: #{tpu_custom_call.1} parent=1 // pred_region
      %s75 = ssub.s32 1024, 1024
      %76 = vsyncadd [#allocation9], %s75
      %s77 = sshll.u32 [#allocation8], 4
      %s78 = int_to_ptr.vmem [resolvable:$true] %s77
      %83 = dma.hbm_to_vmem [thread:$0]  %s4, 1024, %s78, [#allocation9], 64, 64, 4
    $region21: #{tpu_custom_call.1} parent=1 // pred_fallthru
      _
    // Predicated region
    $region22: #{tpu_custom_call.1} parent=1 // pred_check
      _
    $region23: #{tpu_custom_call.1} parent=1 // pred_check_branch
      %85 = sbr.rel (0) target = $region25
    $region24: #{tpu_custom_call.1} parent=1 // pred_region
      _
    $region25: #{tpu_custom_call.1} parent=1 // pred_fallthru
      _
    // Predicated region
    $region26: #{tpu_custom_call.1} parent=1 // pred_check
      _
    $region27: #{tpu_custom_call.1} parent=1 // pred_check_branch
      %87 = sbr.rel (0) target = $region29
    $region28: #{tpu_custom_call.1} parent=1 // pred_region
      %s89 = ssub.s32 1024, 1024
      %90 = vsyncadd [#allocation9], %s89
      %s91 = sshll.u32 [#allocation10], 4
      %s92 = int_to_ptr.vmem [resolvable:$true] %s91
      %97 = dma.hbm_to_vmem [thread:$0]  %s6, 1024, %s92, [#allocation9], 64, 64, 4
    $region29: #{tpu_custom_call.1} parent=1 // pred_fallthru
      _
    // Predicated region
    $region30: #{tpu_custom_call.1} parent=1 // pred_check
      _
    $region31: #{tpu_custom_call.1} parent=1 // pred_check_branch
      %99 = sbr.rel (0) target = $region33
    $region32: #{tpu_custom_call.1} parent=1 // pred_region
      _
    $region33: #{tpu_custom_call.1} parent=1 // pred_fallthru
      _
    // Predicated region
    $region34: #{tpu_custom_call.1} parent=1 // pred_check
      _
    $region35: #{tpu_custom_call.1} parent=1 // pred_check_branch
      %101 = sbr.rel (0) target = $region37
    $region36: #{tpu_custom_call.1} parent=1 // pred_region
      %s103 = ssub.s32 2048, 2048
      %104 = vsyncadd [#allocation12], %s103
      %s105 = sshll.u32 [#allocation11], 4
      %s106 = int_to_ptr.vmem [resolvable:$true] %s105
      %111 = dma.hbm_to_vmem [thread:$0]  %s8, 2048, %s106, [#allocation12], 128, 128, 8
    $region37: #{tpu_custom_call.1} parent=1 // pred_fallthru
      _
    // Predicated region
    $region38: #{tpu_custom_call.1} parent=1 // pred_check
      _
    $region39: #{tpu_custom_call.1} parent=1 // pred_check_branch
      %113 = sbr.rel (0) target = $region41
    $region40: #{tpu_custom_call.1} parent=1 // pred_region
      _
    $region41: #{tpu_custom_call.1} parent=1 // pred_fallthru
      _
    // Predicated region
    $region42: #{tpu_custom_call.1} parent=1 // pred_check
      _
    $region43: #{tpu_custom_call.1} parent=1 // pred_check_branch
      %115 = sbr.rel (0) target = $region45
    $region44: #{tpu_custom_call.1} parent=1 // pred_region
      %s117 = ssub.s32 1024, 1024
      %118 = vsyncadd [#allocation12], %s117
      %s119 = sshll.u32 [#allocation13], 4
      %s120 = int_to_ptr.vmem [resolvable:$true] %s119
      %125 = dma.hbm_to_vmem [thread:$0]  %s10, 1024, %s120, [#allocation12], 64, 64, 4
    $region45: #{tpu_custom_call.1} parent=1 // pred_fallthru
      _
    // Predicated region
    $region46: #{tpu_custom_call.1} parent=1 // pred_check
      _
    $region47: #{tpu_custom_call.1} parent=1 // pred_check_branch
      %127 = sbr.rel (0) target = $region49
    $region48: #{tpu_custom_call.1} parent=1 // pred_region
      _
    $region49: #{tpu_custom_call.1} parent=1 // pred_fallthru
      _
    // Predicated region
    $region50: #{tpu_custom_call.1} parent=1 // pred_check
      _
    $region51: #{tpu_custom_call.1} parent=1 // pred_check_branch
      %129 = sbr.rel (0) target = $region53
    $region52: #{tpu_custom_call.1} parent=1 // pred_region
      %s131 = ssub.s32 1024, 1024
      %132 = vsyncadd [#allocation15], %s131
      %s133 = sshll.u32 [#allocation14], 4
      %s134 = int_to_ptr.vmem [resolvable:$true] %s133
      %139 = dma.hbm_to_vmem [thread:$0]  %s12, 1024, %s134, [#allocation15], 64, 64, 4
    $region53: #{tpu_custom_call.1} parent=1 // pred_fallthru
      _
    // Predicated region
    $region54: #{tpu_custom_call.1} parent=1 // pred_check
      _
    $region55: #{tpu_custom_call.1} parent=1 // pred_check_branch
      %141 = sbr.rel (0) target = $region57
    $region56: #{tpu_custom_call.1} parent=1 // pred_region
      _
    $region57: #{tpu_custom_call.1} parent=1 // pred_fallthru
      _
    // Predicated region
    $region58: #{tpu_custom_call.1} parent=1 // pred_check
      _
    $region59: #{tpu_custom_call.1} parent=1 // pred_check_branch
      %143 = sbr.rel (0) target = $region61
    $region60: #{tpu_custom_call.1} parent=1 // pred_region
      %s145 = ssub.s32 1024, 1024
      %146 = vsyncadd [#allocation15], %s145
      %s147 = sshll.u32 [#allocation16], 4
      %s148 = int_to_ptr.vmem [resolvable:$true] %s147
      %153 = dma.hbm_to_vmem [thread:$0]  %s14, 1024, %s148, [#allocation15], 64, 64, 4
    $region61: #{tpu_custom_call.1} parent=1 // pred_fallthru
      _
    // Predicated region
    $region62: #{tpu_custom_call.1} parent=1 // pred_check
      _
    $region63: #{tpu_custom_call.1} parent=1 // pred_check_branch
      %155 = sbr.rel (0) target = $region65
    $region64: #{tpu_custom_call.1} parent=1 // pred_region
      _
    $region65: #{tpu_custom_call.1} parent=1 // pred_fallthru
      _
    // Predicated region
    $region66: #{tpu_custom_call.1} parent=1 // pred_check
      _
    $region67: #{tpu_custom_call.1} parent=1 // pred_check_branch
      %157 = sbr.rel (0) target = $region69
    $region68: #{tpu_custom_call.1} parent=1 // pred_region
      %s159 = ssub.s32 1024, 1024
      %160 = vsyncadd [#allocation18], %s159
      %s161 = sshll.u32 [#allocation17], 4
      %s162 = int_to_ptr.vmem [resolvable:$true] %s161
      %167 = dma.hbm_to_vmem [thread:$0]  %s16, 1024, %s162, [#allocation18], 64, 64, 4
    $region69: #{tpu_custom_call.1} parent=1 // pred_fallthru
      _
    // Predicated region
    $region70: #{tpu_custom_call.1} parent=1 // pred_check
      _
    $region71: #{tpu_custom_call.1} parent=1 // pred_check_branch
      %169 = sbr.rel (0) target = $region73
    $region72: #{tpu_custom_call.1} parent=1 // pred_region
      _
    $region73: #{tpu_custom_call.1} parent=1 // pred_fallthru
      _
    // Predicated region
    $region74: #{tpu_custom_call.1} parent=1 // pred_check
      _
    $region75: #{tpu_custom_call.1} parent=1 // pred_check_branch
      %171 = sbr.rel (0) target = $region77
    $region76: #{tpu_custom_call.1} parent=1 // pred_region
      %172 = dma.done [#allocation3], 128
    $region77: #{tpu_custom_call.1} parent=1 // pred_fallthru
      _
    // Predicated region
    $region78: #{tpu_custom_call.1} parent=1 // pred_check
      _
    $region79: #{tpu_custom_call.1} parent=1 // pred_check_branch
      %174 = sbr.rel (0) target = $region81
    $region80: #{tpu_custom_call.1} parent=1 // pred_region
      %175 = dma.done [#allocation6], 256
    $region81: #{tpu_custom_call.1} parent=1 // pred_fallthru
      _
    // Predicated region
    $region82: #{tpu_custom_call.1} parent=1 // pred_check
      _
    $region83: #{tpu_custom_call.1} parent=1 // pred_check_branch
      %177 = sbr.rel (0) target = $region85
    $region84: #{tpu_custom_call.1} parent=1 // pred_region
      %178 = dma.done [#allocation6], 1024
    $region85: #{tpu_custom_call.1} parent=1 // pred_fallthru
      _
    // Predicated region
    $region86: #{tpu_custom_call.1} parent=1 // pred_check
      _
    $region87: #{tpu_custom_call.1} parent=1 // pred_check_branch
      %180 = sbr.rel (0) target = $region89
    $region88: #{tpu_custom_call.1} parent=1 // pred_region
      %181 = dma.done [#allocation9], 1024
    $region89: #{tpu_custom_call.1} parent=1 // pred_fallthru
      _
    // Predicated region
    $region90: #{tpu_custom_call.1} parent=1 // pred_check
      _
    $region91: #{tpu_custom_call.1} parent=1 // pred_check_branch
      %183 = sbr.rel (0) target = $region93
    $region92: #{tpu_custom_call.1} parent=1 // pred_region
      %184 = dma.done [#allocation9], 1024
    $region93: #{tpu_custom_call.1} parent=1 // pred_fallthru
      _
    // Predicated region
    $region94: #{tpu_custom_call.1} parent=1 // pred_check
      _
    $region95: #{tpu_custom_call.1} parent=1 // pred_check_branch
      %186 = sbr.rel (0) target = $region97
    $region96: #{tpu_custom_call.1} parent=1 // pred_region
      %187 = dma.done [#allocation12], 2048
    $region97: #{tpu_custom_call.1} parent=1 // pred_fallthru
      _
    // Predicated region
    $region98: #{tpu_custom_call.1} parent=1 // pred_check
      _
    $region99: #{tpu_custom_call.1} parent=1 // pred_check_branch
      %189 = sbr.rel (0) target = $region101
    $region100: #{tpu_custom_call.1} parent=1 // pred_region
      %190 = dma.done [#allocation12], 1024
    $region101: #{tpu_custom_call.1} parent=1 // pred_fallthru
      _
    // Predicated region
    $region102: #{tpu_custom_call.1} parent=1 // pred_check
      _
    $region103: #{tpu_custom_call.1} parent=1 // pred_check_branch
      %192 = sbr.rel (0) target = $region105
    $region104: #{tpu_custom_call.1} parent=1 // pred_region
      %193 = dma.done [#allocation15], 1024
    $region105: #{tpu_custom_call.1} parent=1 // pred_fallthru
      _
    // Predicated region
    $region106: #{tpu_custom_call.1} parent=1 // pred_check
      _
    $region107: #{tpu_custom_call.1} parent=1 // pred_check_branch
      %195 = sbr.rel (0) target = $region109
    $region108: #{tpu_custom_call.1} parent=1 // pred_region
      %196 = dma.done [#allocation15], 1024
    $region109: #{tpu_custom_call.1} parent=1 // pred_fallthru
      _
    // Predicated region
    $region110: #{tpu_custom_call.1} parent=1 // pred_check
      _
    $region111: #{tpu_custom_call.1} parent=1 // pred_check_branch
      %198 = sbr.rel (0) target = $region113
    $region112: #{tpu_custom_call.1} parent=1 // pred_region
      %199 = dma.done [#allocation18], 1024
    $region113: #{tpu_custom_call.1} parent=1 // pred_fallthru
      _
    %v201 = vld [vmem:[#allocation2] sm:$0xf]
    %v202 = vld [vmem:[#allocation2 + $0x4] sm:$0xf]
    %v203 = vld [vmem:[#allocation7] sm:$0xf]
    %v204 = vld [vmem:[#allocation7 + $0x4] sm:$0xf]
    %v205 = vld [vmem:[#allocation7 + $0x8] sm:$0xf]
    %v206 = vld [vmem:[#allocation7 + $0xc] sm:$0xf]
    %v207 = vld [vmem:[#allocation7 + $0x10] sm:$0xf]
    %v208 = vld [vmem:[#allocation7 + $0x14] sm:$0xf]
    %v209 = vld [vmem:[#allocation7 + $0x18] sm:$0xf]
    %v210 = vld [vmem:[#allocation7 + $0x1c] sm:$0xf]
    %v211 = vld [vmem:[#allocation7 + $0x20] sm:$0xf]
    %v212 = vld [vmem:[#allocation7 + $0x24] sm:$0xf]
    %v213 = vld [vmem:[#allocation7 + $0x28] sm:$0xf]
    %v214 = vld [vmem:[#allocation7 + $0x2c] sm:$0xf]
    %v215 = vld [vmem:[#allocation7 + $0x30] sm:$0xf]
    %v216 = vld [vmem:[#allocation7 + $0x34] sm:$0xf]
    %v217 = vld [vmem:[#allocation7 + $0x38] sm:$0xf]
    %v218 = vld [vmem:[#allocation7 + $0x3c] sm:$0xf]
    %v219 = vld [vmem:[%s3] sm:$0x1]
    %v221 = vlaneseq
    %v222 = vshrl.u32 %v221, 7
    %v223 = vsub.s32 0, %v222
    %v224 = vrot.slane %v219, %v223
    %v228 = vunpack.c.l.b16 %v201
    %v229 = vunpack.c.l.b16 %v202
    %v230 = vpack.c.b16 %v229, %v228
    %v248 = vunpack.c.l.b16 %v203
    %v249 = vunpack.c.l.b16 %v204
    %v250 = vunpack.c.l.b16 %v205
    %v251 = vunpack.c.l.b16 %v206
    %v252 = vunpack.c.l.b16 %v207
    %v253 = vunpack.c.l.b16 %v208
    %v254 = vunpack.c.l.b16 %v209
    %v255 = vunpack.c.l.b16 %v210
    %v256 = vunpack.c.l.b16 %v211
    %v257 = vunpack.c.l.b16 %v212
    %v258 = vunpack.c.l.b16 %v213
    %v259 = vunpack.c.l.b16 %v214
    %v260 = vunpack.c.l.b16 %v215
    %v261 = vunpack.c.l.b16 %v216
    %v262 = vunpack.c.l.b16 %v217
    %v263 = vunpack.c.l.b16 %v218
    %v264 = vpack.c.b16 %v249, %v248
    %v265 = vpack.c.b16 %v251, %v250
    %v266 = vpack.c.b16 %v253, %v252
    %v267 = vpack.c.b16 %v255, %v254
    %v268 = vpack.c.b16 %v257, %v256
    %v269 = vpack.c.b16 %v259, %v258
    %v270 = vpack.c.b16 %v261, %v260
    %v271 = vpack.c.b16 %v263, %v262
    %280 = vmatprep.subr.bf16.mxu0 0
    %281 = vmatpush1.bf16.msra.mxu0 %v264
    %282 = vmatprep.subr.bf16.mxu0 0
    %283 = vmatpush1.bf16.msra.mxu0 %v265
    %284 = vmatprep.subr.bf16.mxu0 0
    %285 = vmatpush1.bf16.msra.mxu0 %v266
    %286 = vmatprep.subr.bf16.mxu0 0
    %287 = vmatpush1.bf16.msra.mxu0 %v267
    %288 = vmatprep.subr.bf16.mxu0 0
    %289 = vmatpush1.bf16.msra.mxu0 %v268
    %290 = vmatprep.subr.bf16.mxu0 0
    %291 = vmatpush1.bf16.msra.mxu0 %v269
    %292 = vmatprep.subr.bf16.mxu0 0
    %293 = vmatpush1.bf16.msra.mxu0 %v270
    %294 = vmatprep.subr.bf16.mxu0 0
    %295 = vmatpush1.bf16.msra.mxu0 %v271
    %296 = vmatprep.subr.bf16.mxu0 0
    %297 = vmatpush1.bf16.msra.mxu0 0
    %298 = vmatprep.subr.bf16.mxu0 0
    %299 = vmatpush1.bf16.msra.mxu0 0
    %300 = vmatprep.subr.bf16.mxu0 0
    %301 = vmatpush1.bf16.msra.mxu0 0
    %302 = vmatprep.subr.bf16.mxu0 0
    %303 = vmatpush1.bf16.msra.mxu0 0
    %304 = vmatprep.subr.bf16.mxu0 0
    %305 = vmatpush1.bf16.msra.mxu0 0
    %306 = vmatprep.subr.bf16.mxu0 0
    %307 = vmatpush1.bf16.msra.mxu0 0
    %308 = vmatprep.subr.bf16.mxu0 0
    %309 = vmatpush1.bf16.msra.mxu0 0
    %310 = vmatprep.subr.bf16.mxu0 0
    %311 = vmatpush1.bf16.msra.mxu0 0
    %312 = vmatprep.mubr.bf16.mxu0 0
    %313 = vmatmul.mubr.bf16.gmra.mrb[0].mxu0 %v230
    %v314 = vpop.f32.mrb[0].mxu0
    %v315 = vadd.f32 %v224, %v314
    %v316 = vpop.f32.mrb[0].mxu0
    %v317 = vpop.f32.mrb[0].mxu0
    %v318 = vadd.f32 %v224, %v317
    %v319 = vpop.f32.mrb[0].mxu0
    %320 = vdwg.mxu0
    %v321 = vmax.f32 %v315, 0.0
    %v322 = vmax.f32 %v318, 0.0
    %v323 = vpack.c.bf16 %v322, %v321
    %v324 = vld [vmem:[#allocation8] sm:$0xf]
    %v325 = vld [vmem:[#allocation8 + $0x4] sm:$0xf]
    %v326 = vld [vmem:[#allocation8 + $0x8] sm:$0xf]
    %v327 = vld [vmem:[#allocation8 + $0xc] sm:$0xf]
    %v328 = vld [vmem:[#allocation8 + $0x10] sm:$0xf]
    %v329 = vld [vmem:[#allocation8 + $0x14] sm:$0xf]
    %v330 = vld [vmem:[#allocation8 + $0x18] sm:$0xf]
    %v331 = vld [vmem:[#allocation8 + $0x1c] sm:$0xf]
    %v332 = vld [vmem:[#allocation8 + $0x20] sm:$0xf]
    %v333 = vld [vmem:[#allocation8 + $0x24] sm:$0xf]
    %v334 = vld [vmem:[#allocation8 + $0x28] sm:$0xf]
    %v335 = vld [vmem:[#allocation8 + $0x2c] sm:$0xf]
    %v336 = vld [vmem:[#allocation8 + $0x30] sm:$0xf]
    %v337 = vld [vmem:[#allocation8 + $0x34] sm:$0xf]
    %v338 = vld [vmem:[#allocation8 + $0x38] sm:$0xf]
    %v339 = vld [vmem:[#allocation8 + $0x3c] sm:$0xf]
    %v340 = vld [vmem:[%s5] sm:$0x1]
    %v342 = vlaneseq
    %v343 = vshrl.u32 %v342, 7
    %v344 = vsub.s32 0, %v343
    %v345 = vrot.slane %v340, %v344
    %v363 = vunpack.c.l.b16 %v324
    %v364 = vunpack.c.l.b16 %v325
    %v365 = vunpack.c.l.b16 %v326
    %v366 = vunpack.c.l.b16 %v327
    %v367 = vunpack.c.l.b16 %v328
    %v368 = vunpack.c.l.b16 %v329
    %v369 = vunpack.c.l.b16 %v330
    %v370 = vunpack.c.l.b16 %v331
    %v371 = vunpack.c.l.b16 %v332
    %v372 = vunpack.c.l.b16 %v333
    %v373 = vunpack.c.l.b16 %v334
    %v374 = vunpack.c.l.b16 %v335
    %v375 = vunpack.c.l.b16 %v336
    %v376 = vunpack.c.l.b16 %v337
    %v377 = vunpack.c.l.b16 %v338
    %v378 = vunpack.c.l.b16 %v339
    %v379 = vpack.c.b16 %v364, %v363
    %v380 = vpack.c.b16 %v366, %v365
    %v381 = vpack.c.b16 %v368, %v367
    %v382 = vpack.c.b16 %v370, %v369
    %v383 = vpack.c.b16 %v372, %v371
    %v384 = vpack.c.b16 %v374, %v373
    %v385 = vpack.c.b16 %v376, %v375
    %v386 = vpack.c.b16 %v378, %v377
    %395 = vmatprep.subr.bf16.mxu0 0
    %396 = vmatpush1.bf16.msra.mxu0 %v379
    %397 = vmatprep.subr.bf16.mxu0 0
    %398 = vmatpush1.bf16.msra.mxu0 %v380
    %399 = vmatprep.subr.bf16.mxu0 0
    %400 = vmatpush1.bf16.msra.mxu0 %v381
    %401 = vmatprep.subr.bf16.mxu0 0
    %402 = vmatpush1.bf16.msra.mxu0 %v382
    %403 = vmatprep.subr.bf16.mxu0 0
    %404 = vmatpush1.bf16.msra.mxu0 %v383
    %405 = vmatprep.subr.bf16.mxu0 0
    %406 = vmatpush1.bf16.msra.mxu0 %v384
    %407 = vmatprep.subr.bf16.mxu0 0
    %408 = vmatpush1.bf16.msra.mxu0 %v385
    %409 = vmatprep.subr.bf16.mxu0 0
    %410 = vmatpush1.bf16.msra.mxu0 %v386
    %411 = vmatprep.subr.bf16.mxu0 0
    %412 = vmatpush1.bf16.msra.mxu0 0
    %413 = vmatprep.subr.bf16.mxu0 0
    %414 = vmatpush1.bf16.msra.mxu0 0
    %415 = vmatprep.subr.bf16.mxu0 0
    %416 = vmatpush1.bf16.msra.mxu0 0
    %417 = vmatprep.subr.bf16.mxu0 0
    %418 = vmatpush1.bf16.msra.mxu0 0
    %419 = vmatprep.subr.bf16.mxu0 0
    %420 = vmatpush1.bf16.msra.mxu0 0
    %421 = vmatprep.subr.bf16.mxu0 0
    %422 = vmatpush1.bf16.msra.mxu0 0
    %423 = vmatprep.subr.bf16.mxu0 0
    %424 = vmatpush1.bf16.msra.mxu0 0
    %425 = vmatprep.subr.bf16.mxu0 0
    %426 = vmatpush1.bf16.msra.mxu0 0
    %427 = vmatprep.mubr.bf16.mxu0 0
    %428 = vmatmul.mubr.bf16.gmra.mrb[0].mxu0 %v323
    %v429 = vpop.f32.mrb[0].mxu0
    %v430 = vadd.f32 %v345, %v429
    %v431 = vpop.f32.mrb[0].mxu0
    %v432 = vpop.f32.mrb[0].mxu0
    %v433 = vadd.f32 %v345, %v432
    %v434 = vpop.f32.mrb[0].mxu0
    %435 = vdwg.mxu0
    %v436 = vmax.f32 %v430, 0.0
    %v437 = vmax.f32 %v433, 0.0
    %v438 = vpack.c.bf16 %v437, %v436
    %v439 = vld [vmem:[#allocation10] sm:$0xf]
    %v440 = vld [vmem:[#allocation10 + $0x4] sm:$0xf]
    %v441 = vld [vmem:[#allocation10 + $0x8] sm:$0xf]
    %v442 = vld [vmem:[#allocation10 + $0xc] sm:$0xf]
    %v443 = vld [vmem:[#allocation10 + $0x10] sm:$0xf]
    %v444 = vld [vmem:[#allocation10 + $0x14] sm:$0xf]
    %v445 = vld [vmem:[#allocation10 + $0x18] sm:$0xf]
    %v446 = vld [vmem:[#allocation10 + $0x1c] sm:$0xf]
    %v447 = vld [vmem:[#allocation10 + $0x20] sm:$0xf]
    %v448 = vld [vmem:[#allocation10 + $0x24] sm:$0xf]
    %v449 = vld [vmem:[#allocation10 + $0x28] sm:$0xf]
    %v450 = vld [vmem:[#allocation10 + $0x2c] sm:$0xf]
    %v451 = vld [vmem:[#allocation10 + $0x30] sm:$0xf]
    %v452 = vld [vmem:[#allocation10 + $0x34] sm:$0xf]
    %v453 = vld [vmem:[#allocation10 + $0x38] sm:$0xf]
    %v454 = vld [vmem:[#allocation10 + $0x3c] sm:$0xf]
    %v455 = vld [vmem:[%s7] sm:$0x1]
    %v457 = vlaneseq
    %v458 = vshrl.u32 %v457, 7
    %v459 = vsub.s32 0, %v458
    %v460 = vrot.slane %v455, %v459
    %v478 = vunpack.c.l.b16 %v439
    %v479 = vunpack.c.l.b16 %v440
    %v480 = vunpack.c.l.b16 %v441
    %v481 = vunpack.c.l.b16 %v442
    %v482 = vunpack.c.l.b16 %v443
    %v483 = vunpack.c.l.b16 %v444
    %v484 = vunpack.c.l.b16 %v445
    %v485 = vunpack.c.l.b16 %v446
    %v486 = vunpack.c.l.b16 %v447
    %v487 = vunpack.c.l.b16 %v448
    %v488 = vunpack.c.l.b16 %v449
    %v489 = vunpack.c.l.b16 %v450
    %v490 = vunpack.c.l.b16 %v451
    %v491 = vunpack.c.l.b16 %v452
    %v492 = vunpack.c.l.b16 %v453
    %v493 = vunpack.c.l.b16 %v454
    %v494 = vpack.c.b16 %v479, %v478
    %v495 = vpack.c.b16 %v481, %v480
    %v496 = vpack.c.b16 %v483, %v482
    %v497 = vpack.c.b16 %v485, %v484
    %v498 = vpack.c.b16 %v487, %v486
    %v499 = vpack.c.b16 %v489, %v488
    %v500 = vpack.c.b16 %v491, %v490
    %v501 = vpack.c.b16 %v493, %v492
    %510 = vmatprep.subr.bf16.mxu0 0
    %511 = vmatpush1.bf16.msra.mxu0 %v494
    %512 = vmatprep.subr.bf16.mxu0 0
    %513 = vmatpush1.bf16.msra.mxu0 %v495
    %514 = vmatprep.subr.bf16.mxu0 0
    %515 = vmatpush1.bf16.msra.mxu0 %v496
    %516 = vmatprep.subr.bf16.mxu0 0
    %517 = vmatpush1.bf16.msra.mxu0 %v497
    %518 = vmatprep.subr.bf16.mxu0 0
    %519 = vmatpush1.bf16.msra.mxu0 %v498
    %520 = vmatprep.subr.bf16.mxu0 0
    %521 = vmatpush1.bf16.msra.mxu0 %v499
    %522 = vmatprep.subr.bf16.mxu0 0
    %523 = vmatpush1.bf16.msra.mxu0 %v500
    %524 = vmatprep.subr.bf16.mxu0 0
    %525 = vmatpush1.bf16.msra.mxu0 %v501
    %526 = vmatprep.subr.bf16.mxu0 0
    %527 = vmatpush1.bf16.msra.mxu0 0
    %528 = vmatprep.subr.bf16.mxu0 0
    %529 = vmatpush1.bf16.msra.mxu0 0
    %530 = vmatprep.subr.bf16.mxu0 0
    %531 = vmatpush1.bf16.msra.mxu0 0
    %532 = vmatprep.subr.bf16.mxu0 0
    %533 = vmatpush1.bf16.msra.mxu0 0
    %534 = vmatprep.subr.bf16.mxu0 0
    %535 = vmatpush1.bf16.msra.mxu0 0
    %536 = vmatprep.subr.bf16.mxu0 0
    %537 = vmatpush1.bf16.msra.mxu0 0
    %538 = vmatprep.subr.bf16.mxu0 0
    %539 = vmatpush1.bf16.msra.mxu0 0
    %540 = vmatprep.subr.bf16.mxu0 0
    %541 = vmatpush1.bf16.msra.mxu0 0
    %542 = vmatprep.mubr.bf16.mxu0 0
    %543 = vmatmul.mubr.bf16.gmra.mrb[0].mxu0 %v438
    %v544 = vpop.f32.mrb[0].mxu0
    %v545 = vadd.f32 %v460, %v544
    %v546 = vpop.f32.mrb[0].mxu0
    %v547 = vpop.f32.mrb[0].mxu0
    %v548 = vadd.f32 %v460, %v547
    %v549 = vpop.f32.mrb[0].mxu0
    %550 = vdwg.mxu0
    %v551 = vmax.f32 %v545, 0.0
    %v552 = vmax.f32 %v548, 0.0
    %v553 = vpack.c.bf16 %v552, %v551
    %v554 = vld [vmem:[#allocation11] sm:$0xff]
    %v555 = vld [vmem:[#allocation11 + $0x8] sm:$0xff]
    %v556 = vld [vmem:[#allocation11 + $0x10] sm:$0xff]
    %v557 = vld [vmem:[#allocation11 + $0x18] sm:$0xff]
    %v558 = vld [vmem:[#allocation11 + $0x20] sm:$0xff]
    %v559 = vld [vmem:[#allocation11 + $0x28] sm:$0xff]
    %v560 = vld [vmem:[#allocation11 + $0x30] sm:$0xff]
    %v561 = vld [vmem:[#allocation11 + $0x38] sm:$0xff]
    %v562 = vld [vmem:[#allocation11 + $0x40] sm:$0xff]
    %v563 = vld [vmem:[#allocation11 + $0x48] sm:$0xff]
    %v564 = vld [vmem:[#allocation11 + $0x50] sm:$0xff]
    %v565 = vld [vmem:[#allocation11 + $0x58] sm:$0xff]
    %v566 = vld [vmem:[#allocation11 + $0x60] sm:$0xff]
    %v567 = vld [vmem:[#allocation11 + $0x68] sm:$0xff]
    %v568 = vld [vmem:[#allocation11 + $0x70] sm:$0xff]
    %v569 = vld [vmem:[#allocation11 + $0x78] sm:$0xff]
    %v570 = vld [vmem:[%s9] sm:$0x3]
    %v572 = vlaneseq
    %v573 = vshrl.u32 %v572, 7
    %v574 = vsub.s32 0, %v573
    %v575 = vrot.slane %v570, %v574
    %v576 = vlaneseq
    %v577 = vshrl.u32 %v576, 7
    %v578 = vsub.s32 1, %v577
    %v579 = vrot.slane %v570, %v578
    %v598 = vunpack.c.l.b16 %v554
    %v599 = vunpack.c.h.b16 %v554
    %v600 = vunpack.c.l.b16 %v555
    %v601 = vunpack.c.h.b16 %v555
    %v602 = vunpack.c.l.b16 %v556
    %v603 = vunpack.c.h.b16 %v556
    %v604 = vunpack.c.l.b16 %v557
    %v605 = vunpack.c.h.b16 %v557
    %v606 = vunpack.c.l.b16 %v558
    %v607 = vunpack.c.h.b16 %v558
    %v608 = vunpack.c.l.b16 %v559
    %v609 = vunpack.c.h.b16 %v559
    %v610 = vunpack.c.l.b16 %v560
    %v611 = vunpack.c.h.b16 %v560
    %v612 = vunpack.c.l.b16 %v561
    %v613 = vunpack.c.h.b16 %v561
    %v614 = vunpack.c.l.b16 %v562
    %v615 = vunpack.c.h.b16 %v562
    %v616 = vunpack.c.l.b16 %v563
    %v617 = vunpack.c.h.b16 %v563
    %v618 = vunpack.c.l.b16 %v564
    %v619 = vunpack.c.h.b16 %v564
    %v620 = vunpack.c.l.b16 %v565
    %v621 = vunpack.c.h.b16 %v565
    %v622 = vunpack.c.l.b16 %v566
    %v623 = vunpack.c.h.b16 %v566
    %v624 = vunpack.c.l.b16 %v567
    %v625 = vunpack.c.h.b16 %v567
    %v626 = vunpack.c.l.b16 %v568
    %v627 = vunpack.c.h.b16 %v568
    %v628 = vunpack.c.l.b16 %v569
    %v629 = vunpack.c.h.b16 %v569
    %v630 = vpack.c.b16 %v600, %v598
    %v631 = vpack.c.b16 %v601, %v599
    %v632 = vpack.c.b16 %v604, %v602
    %v633 = vpack.c.b16 %v605, %v603
    %v634 = vpack.c.b16 %v608, %v606
    %v635 = vpack.c.b16 %v609, %v607
    %v636 = vpack.c.b16 %v612, %v610
    %v637 = vpack.c.b16 %v613, %v611
    %v638 = vpack.c.b16 %v616, %v614
    %v639 = vpack.c.b16 %v617, %v615
    %v640 = vpack.c.b16 %v620, %v618
    %v641 = vpack.c.b16 %v621, %v619
    %v642 = vpack.c.b16 %v624, %v622
    %v643 = vpack.c.b16 %v625, %v623
    %v644 = vpack.c.b16 %v628, %v626
    %v645 = vpack.c.b16 %v629, %v627
    %662 = vmatprep.subr.bf16.mxu0 %v631
    %663 = vmatpush1.bf16.msra.mxu0 %v630
    %664 = vmatprep.subr.bf16.mxu0 %v633
    %665 = vmatpush1.bf16.msra.mxu0 %v632
    %666 = vmatprep.subr.bf16.mxu0 %v635
    %667 = vmatpush1.bf16.msra.mxu0 %v634
    %668 = vmatprep.subr.bf16.mxu0 %v637
    %669 = vmatpush1.bf16.msra.mxu0 %v636
    %670 = vmatprep.subr.bf16.mxu0 %v639
    %671 = vmatpush1.bf16.msra.mxu0 %v638
    %672 = vmatprep.subr.bf16.mxu0 %v641
    %673 = vmatpush1.bf16.msra.mxu0 %v640
    %674 = vmatprep.subr.bf16.mxu0 %v643
    %675 = vmatpush1.bf16.msra.mxu0 %v642
    %676 = vmatprep.subr.bf16.mxu0 %v645
    %677 = vmatpush1.bf16.msra.mxu0 %v644
    %678 = vmatprep.subr.bf16.mxu0 0
    %679 = vmatpush1.bf16.msra.mxu0 0
    %680 = vmatprep.subr.bf16.mxu0 0
    %681 = vmatpush1.bf16.msra.mxu0 0
    %682 = vmatprep.subr.bf16.mxu0 0
    %683 = vmatpush1.bf16.msra.mxu0 0
    %684 = vmatprep.subr.bf16.mxu0 0
    %685 = vmatpush1.bf16.msra.mxu0 0
    %686 = vmatprep.subr.bf16.mxu0 0
    %687 = vmatpush1.bf16.msra.mxu0 0
    %688 = vmatprep.subr.bf16.mxu0 0
    %689 = vmatpush1.bf16.msra.mxu0 0
    %690 = vmatprep.subr.bf16.mxu0 0
    %691 = vmatpush1.bf16.msra.mxu0 0
    %692 = vmatprep.subr.bf16.mxu0 0
    %693 = vmatpush1.bf16.msra.mxu0 0
    %694 = vmatprep.mubr.bf16.mxu0 0
    %695 = vmatmul.mubr.bf16.gmra.mrb[0].mxu0 %v553
    %v696 = vpop.f32.mrb[0].mxu0
    %v697 = vadd.f32 %v575, %v696
    %v698 = vpop.f32.mrb[0].mxu0
    %v699 = vadd.f32 %v579, %v698
    %v700 = vpop.f32.mrb[0].mxu0
    %v701 = vadd.f32 %v575, %v700
    %v702 = vpop.f32.mrb[0].mxu0
    %v703 = vadd.f32 %v579, %v702
    %704 = vdwg.mxu0
    %v705 = vmul.f32 %v699, 0.5
    %v706 = vmul.f32 %v703, 0.5
    %v707 = vmul.f32 %v705, 1.442695
    %v708 = vpow.pop %v707
    %v709 = vmul.f32 %v706, 1.442695
    %v710 = vpow.pop %v709
    %v711 = vld [vmem:[#allocation5] sm:$0xff]
    %v712 = vld [vmem:[#allocation5 + $0x8] sm:$0xff]
    %v713 = vmul.f32 %v708, %v711
    %v714 = vmul.f32 %v710, %v712
    %v715 = vadd.f32 %v697, %v713
    %v716 = vadd.f32 %v701, %v714
    %v717 = vpack.c.bf16 %v716, %v715
    %v718 = vld [vmem:[#allocation13] sm:$0xf]
    %v719 = vld [vmem:[#allocation13 + $0x4] sm:$0xf]
    %v720 = vld [vmem:[#allocation13 + $0x8] sm:$0xf]
    %v721 = vld [vmem:[#allocation13 + $0xc] sm:$0xf]
    %v722 = vld [vmem:[#allocation13 + $0x10] sm:$0xf]
    %v723 = vld [vmem:[#allocation13 + $0x14] sm:$0xf]
    %v724 = vld [vmem:[#allocation13 + $0x18] sm:$0xf]
    %v725 = vld [vmem:[#allocation13 + $0x1c] sm:$0xf]
    %v726 = vld [vmem:[#allocation13 + $0x20] sm:$0xf]
    %v727 = vld [vmem:[#allocation13 + $0x24] sm:$0xf]
    %v728 = vld [vmem:[#allocation13 + $0x28] sm:$0xf]
    %v729 = vld [vmem:[#allocation13 + $0x2c] sm:$0xf]
    %v730 = vld [vmem:[#allocation13 + $0x30] sm:$0xf]
    %v731 = vld [vmem:[#allocation13 + $0x34] sm:$0xf]
    %v732 = vld [vmem:[#allocation13 + $0x38] sm:$0xf]
    %v733 = vld [vmem:[#allocation13 + $0x3c] sm:$0xf]
    %v734 = vld [vmem:[%s11] sm:$0x1]
    %v736 = vlaneseq
    %v737 = vshrl.u32 %v736, 7
    %v738 = vsub.s32 0, %v737
    %v739 = vrot.slane %v734, %v738
    %v757 = vunpack.c.l.b16 %v718
    %v758 = vunpack.c.l.b16 %v719
    %v759 = vunpack.c.l.b16 %v720
    %v760 = vunpack.c.l.b16 %v721
    %v761 = vunpack.c.l.b16 %v722
    %v762 = vunpack.c.l.b16 %v723
    %v763 = vunpack.c.l.b16 %v724
    %v764 = vunpack.c.l.b16 %v725
    %v765 = vunpack.c.l.b16 %v726
    %v766 = vunpack.c.l.b16 %v727
    %v767 = vunpack.c.l.b16 %v728
    %v768 = vunpack.c.l.b16 %v729
    %v769 = vunpack.c.l.b16 %v730
    %v770 = vunpack.c.l.b16 %v731
    %v771 = vunpack.c.l.b16 %v732
    %v772 = vunpack.c.l.b16 %v733
    %v773 = vpack.c.b16 %v758, %v757
    %v774 = vpack.c.b16 %v760, %v759
    %v775 = vpack.c.b16 %v762, %v761
    %v776 = vpack.c.b16 %v764, %v763
    %v777 = vpack.c.b16 %v766, %v765
    %v778 = vpack.c.b16 %v768, %v767
    %v779 = vpack.c.b16 %v770, %v769
    %v780 = vpack.c.b16 %v772, %v771
    %789 = vmatprep.subr.bf16.mxu0 0
    %790 = vmatpush1.bf16.msra.mxu0 %v773
    %791 = vmatprep.subr.bf16.mxu0 0
    %792 = vmatpush1.bf16.msra.mxu0 %v774
    %793 = vmatprep.subr.bf16.mxu0 0
    %794 = vmatpush1.bf16.msra.mxu0 %v775
    %795 = vmatprep.subr.bf16.mxu0 0
    %796 = vmatpush1.bf16.msra.mxu0 %v776
    %797 = vmatprep.subr.bf16.mxu0 0
    %798 = vmatpush1.bf16.msra.mxu0 %v777
    %799 = vmatprep.subr.bf16.mxu0 0
    %800 = vmatpush1.bf16.msra.mxu0 %v778
    %801 = vmatprep.subr.bf16.mxu0 0
    %802 = vmatpush1.bf16.msra.mxu0 %v779
    %803 = vmatprep.subr.bf16.mxu0 0
    %804 = vmatpush1.bf16.msra.mxu0 %v780
    %805 = vmatprep.subr.bf16.mxu0 0
    %806 = vmatpush1.bf16.msra.mxu0 0
    %807 = vmatprep.subr.bf16.mxu0 0
    %808 = vmatpush1.bf16.msra.mxu0 0
    %809 = vmatprep.subr.bf16.mxu0 0
    %810 = vmatpush1.bf16.msra.mxu0 0
    %811 = vmatprep.subr.bf16.mxu0 0
    %812 = vmatpush1.bf16.msra.mxu0 0
    %813 = vmatprep.subr.bf16.mxu0 0
    %814 = vmatpush1.bf16.msra.mxu0 0
    %815 = vmatprep.subr.bf16.mxu0 0
    %816 = vmatpush1.bf16.msra.mxu0 0
    %817 = vmatprep.subr.bf16.mxu0 0
    %818 = vmatpush1.bf16.msra.mxu0 0
    %819 = vmatprep.subr.bf16.mxu0 0
    %820 = vmatpush1.bf16.msra.mxu0 0
    %821 = vmatprep.mubr.bf16.mxu0 0
    %822 = vmatmul.mubr.bf16.gmra.mrb[0].mxu0 %v717
    %v823 = vpop.f32.mrb[0].mxu0
    %v824 = vadd.f32 %v739, %v823
    %v825 = vpop.f32.mrb[0].mxu0
    %v826 = vpop.f32.mrb[0].mxu0
    %v827 = vadd.f32 %v739, %v826
    %v828 = vpop.f32.mrb[0].mxu0
    %829 = vdwg.mxu0
    %v830 = vmax.f32 %v824, 0.0
    %v831 = vmax.f32 %v827, 0.0
    %v832 = vpack.c.bf16 %v831, %v830
    %v833 = vld [vmem:[#allocation14] sm:$0xf]
    %v834 = vld [vmem:[#allocation14 + $0x4] sm:$0xf]
    %v835 = vld [vmem:[#allocation14 + $0x8] sm:$0xf]
    %v836 = vld [vmem:[#allocation14 + $0xc] sm:$0xf]
    %v837 = vld [vmem:[#allocation14 + $0x10] sm:$0xf]
    %v838 = vld [vmem:[#allocation14 + $0x14] sm:$0xf]
    %v839 = vld [vmem:[#allocation14 + $0x18] sm:$0xf]
    %v840 = vld [vmem:[#allocation14 + $0x1c] sm:$0xf]
    %v841 = vld [vmem:[#allocation14 + $0x20] sm:$0xf]
    %v842 = vld [vmem:[#allocation14 + $0x24] sm:$0xf]
    %v843 = vld [vmem:[#allocation14 + $0x28] sm:$0xf]
    %v844 = vld [vmem:[#allocation14 + $0x2c] sm:$0xf]
    %v845 = vld [vmem:[#allocation14 + $0x30] sm:$0xf]
    %v846 = vld [vmem:[#allocation14 + $0x34] sm:$0xf]
    %v847 = vld [vmem:[#allocation14 + $0x38] sm:$0xf]
    %v848 = vld [vmem:[#allocation14 + $0x3c] sm:$0xf]
    %v849 = vld [vmem:[%s13] sm:$0x1]
    %v851 = vlaneseq
    %v852 = vshrl.u32 %v851, 7
    %v853 = vsub.s32 0, %v852
    %v854 = vrot.slane %v849, %v853
    %v872 = vunpack.c.l.b16 %v833
    %v873 = vunpack.c.l.b16 %v834
    %v874 = vunpack.c.l.b16 %v835
    %v875 = vunpack.c.l.b16 %v836
    %v876 = vunpack.c.l.b16 %v837
    %v877 = vunpack.c.l.b16 %v838
    %v878 = vunpack.c.l.b16 %v839
    %v879 = vunpack.c.l.b16 %v840
    %v880 = vunpack.c.l.b16 %v841
    %v881 = vunpack.c.l.b16 %v842
    %v882 = vunpack.c.l.b16 %v843
    %v883 = vunpack.c.l.b16 %v844
    %v884 = vunpack.c.l.b16 %v845
    %v885 = vunpack.c.l.b16 %v846
    %v886 = vunpack.c.l.b16 %v847
    %v887 = vunpack.c.l.b16 %v848
    %v888 = vpack.c.b16 %v873, %v872
    %v889 = vpack.c.b16 %v875, %v874
    %v890 = vpack.c.b16 %v877, %v876
    %v891 = vpack.c.b16 %v879, %v878
    %v892 = vpack.c.b16 %v881, %v880
    %v893 = vpack.c.b16 %v883, %v882
    %v894 = vpack.c.b16 %v885, %v884
    %v895 = vpack.c.b16 %v887, %v886
    %904 = vmatprep.subr.bf16.mxu0 0
    %905 = vmatpush1.bf16.msra.mxu0 %v888
    %906 = vmatprep.subr.bf16.mxu0 0
    %907 = vmatpush1.bf16.msra.mxu0 %v889
    %908 = vmatprep.subr.bf16.mxu0 0
    %909 = vmatpush1.bf16.msra.mxu0 %v890
    %910 = vmatprep.subr.bf16.mxu0 0
    %911 = vmatpush1.bf16.msra.mxu0 %v891
    %912 = vmatprep.subr.bf16.mxu0 0
    %913 = vmatpush1.bf16.msra.mxu0 %v892
    %914 = vmatprep.subr.bf16.mxu0 0
    %915 = vmatpush1.bf16.msra.mxu0 %v893
    %916 = vmatprep.subr.bf16.mxu0 0
    %917 = vmatpush1.bf16.msra.mxu0 %v894
    %918 = vmatprep.subr.bf16.mxu0 0
    %919 = vmatpush1.bf16.msra.mxu0 %v895
    %920 = vmatprep.subr.bf16.mxu0 0
    %921 = vmatpush1.bf16.msra.mxu0 0
    %922 = vmatprep.subr.bf16.mxu0 0
    %923 = vmatpush1.bf16.msra.mxu0 0
    %924 = vmatprep.subr.bf16.mxu0 0
    %925 = vmatpush1.bf16.msra.mxu0 0
    %926 = vmatprep.subr.bf16.mxu0 0
    %927 = vmatpush1.bf16.msra.mxu0 0
    %928 = vmatprep.subr.bf16.mxu0 0
    %929 = vmatpush1.bf16.msra.mxu0 0
    %930 = vmatprep.subr.bf16.mxu0 0
    %931 = vmatpush1.bf16.msra.mxu0 0
    %932 = vmatprep.subr.bf16.mxu0 0
    %933 = vmatpush1.bf16.msra.mxu0 0
    %934 = vmatprep.subr.bf16.mxu0 0
    %935 = vmatpush1.bf16.msra.mxu0 0
    %936 = vmatprep.mubr.bf16.mxu0 0
    %937 = vmatmul.mubr.bf16.gmra.mrb[0].mxu0 %v832
    %v938 = vpop.f32.mrb[0].mxu0
    %v939 = vadd.f32 %v854, %v938
    %v940 = vpop.f32.mrb[0].mxu0
    %v941 = vpop.f32.mrb[0].mxu0
    %v942 = vadd.f32 %v854, %v941
    %v943 = vpop.f32.mrb[0].mxu0
    %944 = vdwg.mxu0
    %v945 = vmax.f32 %v939, 0.0
    %v946 = vmax.f32 %v942, 0.0
    %v947 = vpack.c.bf16 %v946, %v945
    %v948 = vld [vmem:[#allocation16] sm:$0xf]
    %v949 = vld [vmem:[#allocation16 + $0x4] sm:$0xf]
    %v950 = vld [vmem:[#allocation16 + $0x8] sm:$0xf]
    %v951 = vld [vmem:[#allocation16 + $0xc] sm:$0xf]
    %v952 = vld [vmem:[#allocation16 + $0x10] sm:$0xf]
    %v953 = vld [vmem:[#allocation16 + $0x14] sm:$0xf]
    %v954 = vld [vmem:[#allocation16 + $0x18] sm:$0xf]
    %v955 = vld [vmem:[#allocation16 + $0x1c] sm:$0xf]
    %v956 = vld [vmem:[#allocation16 + $0x20] sm:$0xf]
    %v957 = vld [vmem:[#allocation16 + $0x24] sm:$0xf]
    %v958 = vld [vmem:[#allocation16 + $0x28] sm:$0xf]
    %v959 = vld [vmem:[#allocation16 + $0x2c] sm:$0xf]
    %v960 = vld [vmem:[#allocation16 + $0x30] sm:$0xf]
    %v961 = vld [vmem:[#allocation16 + $0x34] sm:$0xf]
    %v962 = vld [vmem:[#allocation16 + $0x38] sm:$0xf]
    %v963 = vld [vmem:[#allocation16 + $0x3c] sm:$0xf]
    %v964 = vld [vmem:[%s15] sm:$0x1]
    %v966 = vlaneseq
    %v967 = vshrl.u32 %v966, 7
    %v968 = vsub.s32 0, %v967
    %v969 = vrot.slane %v964, %v968
    %v987 = vunpack.c.l.b16 %v948
    %v988 = vunpack.c.l.b16 %v949
    %v989 = vunpack.c.l.b16 %v950
    %v990 = vunpack.c.l.b16 %v951
    %v991 = vunpack.c.l.b16 %v952
    %v992 = vunpack.c.l.b16 %v953
    %v993 = vunpack.c.l.b16 %v954
    %v994 = vunpack.c.l.b16 %v955
    %v995 = vunpack.c.l.b16 %v956
    %v996 = vunpack.c.l.b16 %v957
    %v997 = vunpack.c.l.b16 %v958
    %v998 = vunpack.c.l.b16 %v959
    %v999 = vunpack.c.l.b16 %v960
    %v1000 = vunpack.c.l.b16 %v961
    %v1001 = vunpack.c.l.b16 %v962
    %v1002 = vunpack.c.l.b16 %v963
    %v1003 = vpack.c.b16 %v988, %v987
    %v1004 = vpack.c.b16 %v990, %v989
    %v1005 = vpack.c.b16 %v992, %v991
    %v1006 = vpack.c.b16 %v994, %v993
    %v1007 = vpack.c.b16 %v996, %v995
    %v1008 = vpack.c.b16 %v998, %v997
    %v1009 = vpack.c.b16 %v1000, %v999
    %v1010 = vpack.c.b16 %v1002, %v1001
    %1019 = vmatprep.subr.bf16.mxu0 0
    %1020 = vmatpush1.bf16.msra.mxu0 %v1003
    %1021 = vmatprep.subr.bf16.mxu0 0
    %1022 = vmatpush1.bf16.msra.mxu0 %v1004
    %1023 = vmatprep.subr.bf16.mxu0 0
    %1024 = vmatpush1.bf16.msra.mxu0 %v1005
    %1025 = vmatprep.subr.bf16.mxu0 0
    %1026 = vmatpush1.bf16.msra.mxu0 %v1006
    %1027 = vmatprep.subr.bf16.mxu0 0
    %1028 = vmatpush1.bf16.msra.mxu0 %v1007
    %1029 = vmatprep.subr.bf16.mxu0 0
    %1030 = vmatpush1.bf16.msra.mxu0 %v1008
    %1031 = vmatprep.subr.bf16.mxu0 0
    %1032 = vmatpush1.bf16.msra.mxu0 %v1009
    %1033 = vmatprep.subr.bf16.mxu0 0
    %1034 = vmatpush1.bf16.msra.mxu0 %v1010
    %1035 = vmatprep.subr.bf16.mxu0 0
    %1036 = vmatpush1.bf16.msra.mxu0 0
    %1037 = vmatprep.subr.bf16.mxu0 0
    %1038 = vmatpush1.bf16.msra.mxu0 0
    %1039 = vmatprep.subr.bf16.mxu0 0
    %1040 = vmatpush1.bf16.msra.mxu0 0
    %1041 = vmatprep.subr.bf16.mxu0 0
    %1042 = vmatpush1.bf16.msra.mxu0 0
    %1043 = vmatprep.subr.bf16.mxu0 0
    %1044 = vmatpush1.bf16.msra.mxu0 0
    %1045 = vmatprep.subr.bf16.mxu0 0
    %1046 = vmatpush1.bf16.msra.mxu0 0
    %1047 = vmatprep.subr.bf16.mxu0 0
    %1048 = vmatpush1.bf16.msra.mxu0 0
    %1049 = vmatprep.subr.bf16.mxu0 0
    %1050 = vmatpush1.bf16.msra.mxu0 0
    %1051 = vmatprep.mubr.bf16.mxu0 0
    %1052 = vmatmul.mubr.bf16.gmra.mrb[0].mxu0 %v947
    %v1053 = vpop.f32.mrb[0].mxu0
    %v1054 = vadd.f32 %v969, %v1053
    %v1055 = vpop.f32.mrb[0].mxu0
    %v1056 = vpop.f32.mrb[0].mxu0
    %v1057 = vadd.f32 %v969, %v1056
    %v1058 = vpop.f32.mrb[0].mxu0
    %1059 = vdwg.mxu0
    %v1060 = vmax.f32 %v1054, 0.0
    %v1061 = vmax.f32 %v1057, 0.0
    %v1062 = vpack.c.bf16 %v1061, %v1060
    %v1063 = vld [vmem:[#allocation17] sm:$0xf]
    %v1064 = vld [vmem:[#allocation17 + $0x4] sm:$0xf]
    %v1065 = vld [vmem:[#allocation17 + $0x8] sm:$0xf]
    %v1066 = vld [vmem:[#allocation17 + $0xc] sm:$0xf]
    %v1067 = vld [vmem:[#allocation17 + $0x10] sm:$0xf]
    %v1068 = vld [vmem:[#allocation17 + $0x14] sm:$0xf]
    %v1069 = vld [vmem:[#allocation17 + $0x18] sm:$0xf]
    %v1070 = vld [vmem:[#allocation17 + $0x1c] sm:$0xf]
    %v1071 = vld [vmem:[#allocation17 + $0x20] sm:$0xf]
    %v1072 = vld [vmem:[#allocation17 + $0x24] sm:$0xf]
    %v1073 = vld [vmem:[#allocation17 + $0x28] sm:$0xf]
    %v1074 = vld [vmem:[#allocation17 + $0x2c] sm:$0xf]
    %v1075 = vld [vmem:[#allocation17 + $0x30] sm:$0xf]
    %v1076 = vld [vmem:[#allocation17 + $0x34] sm:$0xf]
    %v1077 = vld [vmem:[#allocation17 + $0x38] sm:$0xf]
    %v1078 = vld [vmem:[#allocation17 + $0x3c] sm:$0xf]
    %v1079 = vld [vmem:[%s17] sm:$0x1]
    %v1081 = vlaneseq
    %v1082 = vshrl.u32 %v1081, 7
    %v1083 = vsub.s32 0, %v1082
    %v1084 = vrot.slane %v1079, %v1083
    %v1102 = vunpack.c.l.b16 %v1063
    %v1103 = vunpack.c.l.b16 %v1064
    %v1104 = vunpack.c.l.b16 %v1065
    %v1105 = vunpack.c.l.b16 %v1066
    %v1106 = vunpack.c.l.b16 %v1067
    %v1107 = vunpack.c.l.b16 %v1068
    %v1108 = vunpack.c.l.b16 %v1069
    %v1109 = vunpack.c.l.b16 %v1070
    %v1110 = vunpack.c.l.b16 %v1071
    %v1111 = vunpack.c.l.b16 %v1072
    %v1112 = vunpack.c.l.b16 %v1073
    %v1113 = vunpack.c.l.b16 %v1074
    %v1114 = vunpack.c.l.b16 %v1075
    %v1115 = vunpack.c.l.b16 %v1076
    %v1116 = vunpack.c.l.b16 %v1077
    %v1117 = vunpack.c.l.b16 %v1078
    %v1118 = vpack.c.b16 %v1103, %v1102
    %v1119 = vpack.c.b16 %v1105, %v1104
    %v1120 = vpack.c.b16 %v1107, %v1106
    %v1121 = vpack.c.b16 %v1109, %v1108
    %v1122 = vpack.c.b16 %v1111, %v1110
    %v1123 = vpack.c.b16 %v1113, %v1112
    %v1124 = vpack.c.b16 %v1115, %v1114
    %v1125 = vpack.c.b16 %v1117, %v1116
    %1134 = vmatprep.subr.bf16.mxu0 0
    %1135 = vmatpush1.bf16.msra.mxu0 %v1118
    %1136 = vmatprep.subr.bf16.mxu0 0
    %1137 = vmatpush1.bf16.msra.mxu0 %v1119
    %1138 = vmatprep.subr.bf16.mxu0 0
    %1139 = vmatpush1.bf16.msra.mxu0 %v1120
    %1140 = vmatprep.subr.bf16.mxu0 0
    %1141 = vmatpush1.bf16.msra.mxu0 %v1121
    %1142 = vmatprep.subr.bf16.mxu0 0
    %1143 = vmatpush1.bf16.msra.mxu0 %v1122
    %1144 = vmatprep.subr.bf16.mxu0 0
    %1145 = vmatpush1.bf16.msra.mxu0 %v1123
    %1146 = vmatprep.subr.bf16.mxu0 0
    %1147 = vmatpush1.bf16.msra.mxu0 %v1124
    %1148 = vmatprep.subr.bf16.mxu0 0
    %1149 = vmatpush1.bf16.msra.mxu0 %v1125
    %1150 = vmatprep.subr.bf16.mxu0 0
    %1151 = vmatpush1.bf16.msra.mxu0 0
    %1152 = vmatprep.subr.bf16.mxu0 0
    %1153 = vmatpush1.bf16.msra.mxu0 0
    %1154 = vmatprep.subr.bf16.mxu0 0
    %1155 = vmatpush1.bf16.msra.mxu0 0
    %1156 = vmatprep.subr.bf16.mxu0 0
    %1157 = vmatpush1.bf16.msra.mxu0 0
    %1158 = vmatprep.subr.bf16.mxu0 0
    %1159 = vmatpush1.bf16.msra.mxu0 0
    %1160 = vmatprep.subr.bf16.mxu0 0
    %1161 = vmatpush1.bf16.msra.mxu0 0
    %1162 = vmatprep.subr.bf16.mxu0 0
    %1163 = vmatpush1.bf16.msra.mxu0 0
    %1164 = vmatprep.subr.bf16.mxu0 0
    %1165 = vmatpush1.bf16.msra.mxu0 0
    %1166 = vmatprep.mubr.bf16.mxu0 0
    %1167 = vmatmul.mubr.bf16.gmra.mrb[0].mxu0 %v1062
    %v1168 = vpop.f32.mrb[0].mxu0
    %v1169 = vadd.f32 %v1084, %v1168
    %v1170 = vpop.f32.mrb[0].mxu0
    %v1171 = vpop.f32.mrb[0].mxu0
    %v1172 = vadd.f32 %v1084, %v1171
    %v1173 = vpop.f32.mrb[0].mxu0
    %1174 = vdwg.mxu0
    %1175 = vst [vmem:[#allocation19] sm:$0xff] %v1169
    %1176 = vst [vmem:[#allocation19 + $0x8] sm:$0xff] %v1172
    %1177 = vst [vmem:[#allocation20] sm:$0xff] %v697
    %1178 = vst [vmem:[#allocation20 + $0x8] sm:$0xff] %v701
    %1179 = vst [vmem:[#allocation22] sm:$0xff] %v699
    %1180 = vst [vmem:[#allocation22 + $0x8] sm:$0xff] %v703
    // Predicated region
    $region114: #{tpu_custom_call.1} parent=1 // pred_check
      _
    $region115: #{tpu_custom_call.1} parent=1 // pred_check_branch
      %1182 = sbr.rel (0) target = $region117
    $region116: #{tpu_custom_call.1} parent=1 // pred_region
      %s1184 = ssub.s32 256, 256
      %1185 = vsyncadd [#allocation4], %s1184
      %s1186 = sshll.u32 [#allocation19], 4
      %s1187 = int_to_ptr.vmem [resolvable:$true] %s1186
      %1192 = dma.vmem_to_hbm [thread:$0]  %s1187, 256, %s18, [#allocation4], 128, 128, 8
    $region117: #{tpu_custom_call.1} parent=1 // pred_fallthru
      _
    // Predicated region
    $region118: #{tpu_custom_call.1} parent=1 // pred_check
      _
    $region119: #{tpu_custom_call.1} parent=1 // pred_check_branch
      %1194 = sbr.rel (0) target = $region121
    $region120: #{tpu_custom_call.1} parent=1 // pred_region
      %s1196 = ssub.s32 256, 256
      %1197 = vsyncadd [#allocation21], %s1196
      %s1198 = sshll.u32 [#allocation20], 4
      %s1199 = int_to_ptr.vmem [resolvable:$true] %s1198
      %1204 = dma.vmem_to_hbm [thread:$0]  %s1199, 256, %s19, [#allocation21], 128, 128, 8
    $region121: #{tpu_custom_call.1} parent=1 // pred_fallthru
      _
    // Predicated region
    $region122: #{tpu_custom_call.1} parent=1 // pred_check
      _
    $region123: #{tpu_custom_call.1} parent=1 // pred_check_branch
      %1206 = sbr.rel (0) target = $region125
    $region124: #{tpu_custom_call.1} parent=1 // pred_region
      %s1208 = ssub.s32 256, 256
      %1209 = vsyncadd [#allocation21], %s1208
      %s1210 = sshll.u32 [#allocation22], 4
      %s1211 = int_to_ptr.vmem [resolvable:$true] %s1210
      %1216 = dma.vmem_to_hbm [thread:$0]  %s1211, 256, %s20, [#allocation21], 128, 128, 8
    $region125: #{tpu_custom_call.1} parent=1 // pred_fallthru
      _
    // Predicated region
    $region126: #{tpu_custom_call.1} parent=1 // pred_check
      _
    $region127: #{tpu_custom_call.1} parent=1 // pred_check_branch
      %1218 = sbr.rel (0) target = $region129
    $region128: #{tpu_custom_call.1} parent=1 // pred_region
      %1219 = dma.done [#allocation4], 256
    $region129: #{tpu_custom_call.1} parent=1 // pred_fallthru
      _
    // Predicated region
    $region130: #{tpu_custom_call.1} parent=1 // pred_check
      _
    $region131: #{tpu_custom_call.1} parent=1 // pred_check_branch
      %1221 = sbr.rel (0) target = $region133
    $region132: #{tpu_custom_call.1} parent=1 // pred_region
      %1222 = dma.done [#allocation21], 256
    $region133: #{tpu_custom_call.1} parent=1 // pred_fallthru
      _
    // Predicated region
    $region134: #{tpu_custom_call.1} parent=1 // pred_check
      _
    $region135: #{tpu_custom_call.1} parent=1 // pred_check_branch
      %1224 = sbr.rel (0) target = $region137
    $region136: #{tpu_custom_call.1} parent=1 // pred_region
      %1225 = dma.done [#allocation21], 256
    $region137: #{tpu_custom_call.1} parent=1 // pred_fallthru
      _
    %1226 = vsyncpa [#allocation3], 1
    %1227 = vsyncpa [#allocation6], 1
    %1228 = vsyncpa [#allocation9], 1
    %1229 = vsyncpa [#allocation12], 1
    %1230 = vsyncpa [#allocation15], 1
    %1231 = vsyncpa [#allocation18], 1
    %1232 = vsyncpa [#allocation4], 1
    %1233 = vsyncpa [#allocation21], 1

</llo_original>
